<compile_context>
chip_gen: v5e
topology: v5e:2x2
jax: 0.10.0
libtpu: 0.0.40
codegen_flags: <defaults>
</compile_context>

<pallas_src>
import jax
import jax.numpy as jnp
from jax.experimental import pallas as pl
from jax.experimental.pallas import tpu as pltpu


def _round_up(x, m):
    return ((x + m - 1) // m) * m


def _pick_t_chunk(T, max_chunk=64):
    """Largest divisor of T that is <= max_chunk (bounds resident VMEM)."""
    tc = min(T, max_chunk)
    while T % tc:
        tc -= 1
    return tc


# ----------------------------------------------------------------------------
# Pallas kernel: one (direction, time-chunk) per grid step.
#   gi_ref  : (Tc, Bp, 3*Hp) f32   precomputed x-gates (+ fused r/z biases)
#   whh_ref : (Hp, 3*Hp)     bf16  pre-transposed, gate-fused, padded W_hh
#   bhhn_ref: (1, Hp)        f32   hidden bias of the 'n' gate
#   o_ref   : (Tc, Bp, Hp)   f32   hidden-state outputs for this chunk
#   h_ref   : (Bp, Hp)       f32   VMEM scratch carrying h across time chunks
# ----------------------------------------------------------------------------
def gru_kernel(gi_ref, whh_ref, bhhn_ref, o_ref, h_ref):
    Tc, Bp, G = gi_ref.shape
    Hp = G // 3

    @pl.when(pl.program_id(1) == 0)
    def _init():
        h_ref[...] = jnp.zeros_like(h_ref)

    whh = whh_ref[...]                                     # (Hp, 3Hp) bf16, loaded once
    bhh_n = jnp.broadcast_to(bhhn_ref[...], (Bp, Hp))      # broadcast hoisted out of loop

    def step(t, h):
        gi_t = gi_ref[t]                                                   # (Bp, 3Hp)
        gh = jnp.dot(h.astype(jnp.bfloat16), whh,
                     preferred_element_type=jnp.float32)                   # (Bp, 3Hp)
        # Hp is a multiple of 128 -> all gate slices are whole-tile lane slices.
        r = jax.nn.sigmoid(gi_t[:, 0:Hp] + gh[:, 0:Hp])
        z = jax.nn.sigmoid(gi_t[:, Hp:2 * Hp] + gh[:, Hp:2 * Hp])
        n = jnp.tanh(gi_t[:, 2 * Hp:3 * Hp] + r * (gh[:, 2 * Hp:3 * Hp] + bhh_n))
        h_new = n + z * (h - n)          # == (1-z)*n + z*h, one fewer VPU op
        o_ref[t] = h_new                 # lane-dense (Bp, Hp) store
        return h_new

    if Tc <= 16:
        unroll = True
    else:
        unroll = max(u for u in (8, 4, 2, 1) if Tc % u == 0)

    h_ref[...] = jax.lax.fori_loop(0, Tc, step, h_ref[...], unroll=unroll)


def gru_recurrence(gi, whh_T, bhh_n, *, t_chunk=None):
    """Run the serial GRU recurrence for D stacked directions.

    gi:    (D, T, Bp, 3*Hp)  precomputed input gates (time order already reversed
                             for the backward direction); Bp % 8 == 0, Hp % 128 == 0
    whh_T: (D, Hp, 3*Hp)     bf16
    bhh_n: (D, 1, Hp)        f32
    returns (D, T, Bp, Hp)   f32
    """
    D, T, Bp, G = gi.shape
    Hp = G // 3
    Tc = _pick_t_chunk(T) if t_chunk is None else t_chunk
    assert T % Tc == 0
    C = T // Tc

    return pl.pallas_call(
        gru_kernel,
        out_shape=jax.ShapeDtypeStruct((D, T, Bp, Hp), jnp.float32),
        grid=(D, C),
        in_specs=[
            pl.BlockSpec((None, Tc, Bp, G), lambda d, c: (d, c, 0, 0)),   # gi chunk
            pl.BlockSpec((None, Hp, G), lambda d, c: (d, 0, 0)),          # W_hh^T (no re-DMA over c)
            pl.BlockSpec((None, 1, Hp), lambda d, c: (d, 0, 0)),          # b_hh_n
        ],
        out_specs=pl.BlockSpec((None, Tc, Bp, Hp), lambda d, c: (d, c, 0, 0)),
        scratch_shapes=[pltpu.VMEM((Bp, Hp), jnp.float32)],               # carried h
        compiler_params=pltpu.CompilerParams(
            # Directions independent -> parallel; time chunks carry h -> arbitrary.
            dimension_semantics=("parallel", "arbitrary"),
            vmem_limit_bytes=48 * 1024 * 1024,   # budgeted for v7x 64 MiB physical
        ),
    )(gi, whh_T, bhh_n)


# ----------------------------------------------------------------------------
# BaseEncoder forward (batch_first interface, like the PyTorch module).
# Internally time-major, batch padded once to a multiple of 8.
# ----------------------------------------------------------------------------
def base_encoder_forward(x_bt, layers, skip_step=0):
    """x_bt: (B, T, insize). layers: list of param dicts (see make_params)."""
    B, T, _ = x_bt.shape
    Bp = _round_up(B, 8)
    x_tm = jnp.transpose(x_bt, (1, 0, 2))                       # (T, B, F), once
    x_tm = jnp.pad(x_tm, ((0, 0), (0, Bp - B), (0, 0)))         # pad batch once

    for layer in layers:
        D = 2 if layer["bidirectional"] else 1
        H = layer["H"]
        if D == 2:
            # backward direction consumes the time-reversed sequence
            x_dirs = jnp.stack([x_tm, x_tm[::-1]], axis=0)      # (2, T, Bp, I)
        else:
            x_dirs = x_tm[None]                                 # (1, T, Bp, I)

        # Hoisted input-to-hidden gates: one big parallel matmul over all T.
        gi = (jnp.einsum("dtbi,dig->dtbg", x_dirs, layer["wih_T"])
              + layer["gi_bias"][:, None, None, :])             # (D, T, Bp, 3Hp)

        y = gru_recurrence(gi, layer["whh_T"], layer["bhh_n"])  # (D, T, Bp, Hp)
        y = y[..., :H]                                          # drop hidden padding

        if D == 2:
            x_tm = jnp.concatenate([y[0], y[1][::-1]], axis=-1)  # (T, Bp, 2H)
        else:
            x_tm = y[0]                                          # (T, Bp, H)

        # Dropout: eval-mode identity.
        # TODO(synk): training-mode dropout via pltpu.prng_* not implemented.
        if skip_step > 1:
            x_tm = x_tm[::skip_step]

    x_tm = x_tm[:, :B, :]                                        # drop batch padding
    return jnp.transpose(x_tm, (1, 0, 2))                        # back to (B, T, hidden)


# ----------------------------------------------------------------------------
# Pure-JAX reference (lax.scan, standard PyTorch GRU equations, f32) for checking
# ----------------------------------------------------------------------------
def gru_direction_ref(x_tm, wih, whh, bih, bhh, *, reverse: bool):
    T, B, I = x_tm.shape
    H = wih.shape[1]
    xs = x_tm[::-1] if reverse else x_tm

    def step(h, x_t):
        gi = [x_t @ wih[i].T + bih[i] for i in range(3)]
        gh = [h @ whh[i].T + bhh[i] for i in range(3)]
        r = jax.nn.sigmoid(gi[0] + gh[0])
        z = jax.nn.sigmoid(gi[1] + gh[1])
        n = jnp.tanh(gi[2] + r * gh[2])
        h_new = (1.0 - z) * n + z * h
        return h_new, h_new

    _, ys = jax.lax.scan(step, jnp.zeros((B, H), jnp.float32), xs)
    return ys[::-1] if reverse else ys


def base_encoder_ref(x_bt, layers, skip_step=0):
    for layer in layers:
        x_tm = jnp.transpose(x_bt, (1, 0, 2))
        raw = layer["raw"]
        y_f = gru_direction_ref(x_tm, raw[0]["wih"], raw[0]["whh"],
                                raw[0]["bih"], raw[0]["bhh"], reverse=False)
        if layer["bidirectional"]:
            y_b = gru_direction_ref(x_tm, raw[1]["wih"], raw[1]["whh"],
                                    raw[1]["bih"], raw[1]["bhh"], reverse=True)
            y_tm = jnp.concatenate([y_f, y_b], axis=-1)
        else:
            y_tm = y_f
        x_bt = jnp.transpose(y_tm, (1, 0, 2))
        if skip_step > 1:
            x_bt = x_bt[:, ::skip_step, :]
    return x_bt


# ----------------------------------------------------------------------------
# Deterministic parameter construction (nn.GRU shapes / init scale), plus the
# fused / pre-transposed / padded layout the kernel consumes.
# ----------------------------------------------------------------------------
def make_params(key, insize, hidden_size, bid, rnn):
    layers = []
    for b, r in zip(bid, rnn):
        assert r == "GRU"  # TODO(synk): LSTM/RNN variants not implemented
        H = hidden_size // 2 if b else hidden_size
        Hp = _round_up(H, 128)     # lane-dense padding
        D = 2 if b else 1
        scale = 1.0 / jnp.sqrt(H)

        def uni(k, shape):
            return jax.random.uniform(k, shape, jnp.float32, -scale, scale)

        raw, wih_T, whh_T, gi_bias, bhh_n = [], [], [], [], []
        for _ in range(D):
            key, k1, k2, k3, k4 = jax.random.split(key, 5)
            wih = uni(k1, (3, H, insize))   # gate order (r, z, n), PyTorch layout
            whh = uni(k2, (3, H, H))
            bih = uni(k3, (3, H))
            bhh = uni(k4, (3, H))
            raw.append(dict(wih=wih, whh=whh, bih=bih, bhh=bhh))

            # Fused + pre-transposed + zero-padded kernel layout.
            # Zero padding keeps padded hidden columns exactly 0 through the
            # recurrence, so no masking is needed in-kernel.
            wt = jnp.zeros((insize, 3 * Hp), jnp.float32)
            ht = jnp.zeros((Hp, 3 * Hp), jnp.float32)
            gb = jnp.zeros((3 * Hp,), jnp.float32)
            bn = jnp.zeros((1, Hp), jnp.float32)
            for g in range(3):
                wt = wt.at[:, g * Hp:g * Hp + H].set(wih[g].T)
                ht = ht.at[:H, g * Hp:g * Hp + H].set(whh[g].T)
            # Pre-sum b_ih + b_hh for r and z; keep b_hh_n separate (r*(...)).
            gb = gb.at[0:H].set(bih[0] + bhh[0])
            gb = gb.at[Hp:Hp + H].set(bih[1] + bhh[1])
            gb = gb.at[2 * Hp:2 * Hp + H].set(bih[2])
            bn = bn.at[0, :H].set(bhh[2])

            wih_T.append(wt)
            whh_T.append(ht.astype(jnp.bfloat16))   # bf16 MXU operand, f32 accumulate
            gi_bias.append(gb)
            bhh_n.append(bn)

        layers.append({
            "bidirectional": b,
            "H": H,
            "Hp": Hp,
            "raw": raw,
            "wih_T": jnp.stack(wih_T),      # (D, I, 3Hp)  f32
            "whh_T": jnp.stack(whh_T),      # (D, Hp, 3Hp) bf16
            "gi_bias": jnp.stack(gi_bias),  # (D, 3Hp)     f32
            "bhh_n": jnp.stack(bhh_n),      # (D, 1, Hp)   f32
        })
        insize = hidden_size
    return layers


if __name__ == "__main__":
    # Config mirroring BaseEncoder(insize=32, hidden_size=32,
    #                              drop=[0.1, 0.2], bid=[True, False],
    #                              rnn=["GRU", "GRU"])
    B, T, insize, hidden_size = 2, 8, 32, 32
    bid = [True, False]
    rnn = ["GRU", "GRU"]

    key = jax.random.PRNGKey(0)
    kx, kp = jax.random.split(key)
    x = jax.random.normal(kx, (B, T, insize), jnp.float32)
    layers = make_params(kp, insize, hidden_size, bid, rnn)

    out = base_encoder_forward(x, layers, skip_step=0)
    out = jax.block_until_ready(out)

    ref = base_encoder_ref(x, layers, skip_step=0)
    assert out.shape == (B, T, hidden_size), out.shape
    # Tolerance accounts for bf16 MXU operands on the h @ W_hh path
    # (f32 accumulation, f32 elementwise gates).
    max_err = float(jnp.max(jnp.abs(out - ref)))
    assert jnp.allclose(out, ref, atol=5e-2, rtol=5e-2), max_err

    print("KERNEL_OK")
</pallas_src>

<mosaic_0001>
module attributes {stable_mosaic.version = 11 : i64} {
  func.func @gru_kernel(%arg0: i32, %arg1: i32, %arg2: memref<1x8x8x384xf32, #tpu.memory_space<vmem>>, %arg3: memref<1x128x384xbf16, #tpu.memory_space<vmem>>, %arg4: memref<1x1x128xf32, #tpu.memory_space<vmem>>, %arg5: memref<1x8x8x128xf32, #tpu.memory_space<vmem>>, %arg6: memref<8x128xf32, #tpu.memory_space<vmem>>) attributes {dimension_semantics = [#tpu.dimension_semantics<parallel>, #tpu.dimension_semantics<arbitrary>], iteration_bounds = array<i64: 2, 1>, scalar_prefetch = 0 : i64, scratch_operands = 1 : i64, tpu.core_type = #tpu.core_type<tc>, window_params = [{transform_indices = @transform_0, window_bounds = array<i64: 1, 8, 8, 384>}, {transform_indices = @transform_1, window_bounds = array<i64: 1, 128, 384>}, {transform_indices = @transform_2, window_bounds = array<i64: 1, 1, 128>}, {transform_indices = @transform_3, window_bounds = array<i64: 1, 8, 8, 128>}]} {
    %c0_i32 = arith.constant 0 : i32
    %0 = arith.cmpi eq, %arg1, %c0_i32 : i32
    %1 = arith.extui %0 : i1 to i32
    %c0_i32_0 = arith.constant 0 : i32
    %2 = arith.cmpi ne, %1, %c0_i32_0 : i32
    scf.if %2 {
      %cst_82 = arith.constant 0.000000e+00 : f32
      %283 = vector.broadcast %cst_82 : f32 to vector<8x128xf32>
      %c0_83 = arith.constant 0 : index
      %c0_84 = arith.constant 0 : index
      %284 = vector.load %arg6[%c0_83, %c0_84] : memref<8x128xf32, #tpu.memory_space<vmem>>, vector<8x128xf32>
      tpu.vector_store %arg6[%c0_83, %c0_84], %283 {strides = array<i32>} : memref<8x128xf32, #tpu.memory_space<vmem>>, vector<8x128xf32>,
    } else {
    }
    %c0 = arith.constant 0 : index
    %c0_1 = arith.constant 0 : index
    %c0_2 = arith.constant 0 : index
    %3 = vector.load %arg3[%c0, %c0_1, %c0_2] : memref<1x128x384xbf16, #tpu.memory_space<vmem>>, vector<1x128x384xbf16>
    %4 = vector.shape_cast %3 : vector<1x128x384xbf16> to vector<128x384xbf16>
    %c0_3 = arith.constant 0 : index
    %c0_4 = arith.constant 0 : index
    %c0_5 = arith.constant 0 : index
    %5 = vector.load %arg4[%c0_3, %c0_4, %c0_5] : memref<1x1x128xf32, #tpu.memory_space<vmem>>, vector<1x1x128xf32>
    %6 = vector.shape_cast %5 : vector<1x1x128xf32> to vector<1x128xf32>
    %7 = vector.shape_cast %6 : vector<1x128xf32> to vector<1x128xf32>
    %8 = vector.broadcast %7 : vector<1x128xf32> to vector<8x128xf32>
    %c0_6 = arith.constant 0 : index
    %c0_7 = arith.constant 0 : index
    %9 = vector.load %arg6[%c0_6, %c0_7] : memref<8x128xf32, #tpu.memory_space<vmem>>, vector<8x128xf32>
    %c0_i32_8 = arith.constant 0 : i32
    %c0_9 = arith.constant 0 : index
    %10 = arith.index_cast %c0_i32_8 : i32 to index
    %c0_10 = arith.constant 0 : index
    %c0_11 = arith.constant 0 : index
    %11 = vector.load %arg2[%c0_9, %10, %c0_10, %c0_11] : memref<1x8x8x384xf32, #tpu.memory_space<vmem>>, vector<1x1x8x384xf32>
    %12 = vector.shape_cast %11 : vector<1x1x8x384xf32> to vector<8x384xf32>
    %13 = arith.truncf %9 : vector<8x128xf32> to vector<8x128xbf16>
    %cst = arith.constant dense<0.000000e+00> : vector<8x384xf32>
    %14 = tpu.matmul %13, %4, %cst {dimension_numbers = #tpu.dot_dimension_numbers<[1], [0], [0], [1], [0, 0, 1, 1], [], []>} : vector<8x128xbf16>, vector<128x384xbf16>, vector<8x384xf32> -> vector<8x384xf32>
    %15 = vector.extract_strided_slice %12 {offsets = [0, 0], sizes = [8, 128], strides = [1, 1]} : vector<8x384xf32> to vector<8x128xf32>
    %16 = vector.extract_strided_slice %14 {offsets = [0, 0], sizes = [8, 128], strides = [1, 1]} : vector<8x384xf32> to vector<8x128xf32>
    %17 = arith.addf %15, %16 : vector<8x128xf32>
    %18 = arith.negf %17 : vector<8x128xf32>
    %19 = math.exp %18 : vector<8x128xf32>
    %cst_12 = arith.constant 1.000000e+00 : f32
    %20 = vector.broadcast %cst_12 : f32 to vector<8x128xf32>
    %21 = arith.addf %20, %19 : vector<8x128xf32>
    %22 = arith.divf %20, %21 : vector<8x128xf32>
    %23 = vector.extract_strided_slice %12 {offsets = [0, 128], sizes = [8, 128], strides = [1, 1]} : vector<8x384xf32> to vector<8x128xf32>
    %24 = vector.extract_strided_slice %14 {offsets = [0, 128], sizes = [8, 128], strides = [1, 1]} : vector<8x384xf32> to vector<8x128xf32>
    %25 = arith.addf %23, %24 : vector<8x128xf32>
    %26 = arith.negf %25 : vector<8x128xf32>
    %27 = math.exp %26 : vector<8x128xf32>
    %cst_13 = arith.constant 1.000000e+00 : f32
    %28 = vector.broadcast %cst_13 : f32 to vector<8x128xf32>
    %29 = arith.addf %28, %27 : vector<8x128xf32>
    %30 = arith.divf %28, %29 : vector<8x128xf32>
    %31 = vector.extract_strided_slice %12 {offsets = [0, 256], sizes = [8, 128], strides = [1, 1]} : vector<8x384xf32> to vector<8x128xf32>
    %32 = vector.extract_strided_slice %14 {offsets = [0, 256], sizes = [8, 128], strides = [1, 1]} : vector<8x384xf32> to vector<8x128xf32>
    %33 = arith.addf %32, %8 : vector<8x128xf32>
    %34 = arith.mulf %22, %33 : vector<8x128xf32>
    %35 = arith.addf %31, %34 : vector<8x128xf32>
    %36 = math.tanh %35 : vector<8x128xf32>
    %37 = arith.subf %9, %36 : vector<8x128xf32>
    %38 = arith.mulf %30, %37 : vector<8x128xf32>
    %39 = arith.addf %36, %38 : vector<8x128xf32>
    %c0_14 = arith.constant 0 : index
    %40 = arith.index_cast %c0_i32_8 : i32 to index
    %c0_15 = arith.constant 0 : index
    %c0_16 = arith.constant 0 : index
    %41 = vector.load %arg5[%c0_14, %40, %c0_15, %c0_16] : memref<1x8x8x128xf32, #tpu.memory_space<vmem>>, vector<1x1x8x128xf32>
    %42 = vector.shape_cast %41 : vector<1x1x8x128xf32> to vector<8x128xf32>
    %43 = vector.shape_cast %39 : vector<8x128xf32> to vector<1x1x8x128xf32>
    tpu.vector_store %arg5[%c0_14, %40, %c0_15, %c0_16], %43 {strides = array<i32>} : memref<1x8x8x128xf32, #tpu.memory_space<vmem>>, vector<1x1x8x128xf32>,
    %c1_i32 = arith.constant 1 : i32
    %c0_17 = arith.constant 0 : index
    %44 = arith.index_cast %c1_i32 : i32 to index
    %c0_18 = arith.constant 0 : index
    %c0_19 = arith.constant 0 : index
    %45 = vector.load %arg2[%c0_17, %44, %c0_18, %c0_19] : memref<1x8x8x384xf32, #tpu.memory_space<vmem>>, vector<1x1x8x384xf32>
    %46 = vector.shape_cast %45 : vector<1x1x8x384xf32> to vector<8x384xf32>
    %47 = arith.truncf %39 : vector<8x128xf32> to vector<8x128xbf16>
    %cst_20 = arith.constant dense<0.000000e+00> : vector<8x384xf32>
    %48 = tpu.matmul %47, %4, %cst_20 {dimension_numbers = #tpu.dot_dimension_numbers<[1], [0], [0], [1], [0, 0, 1, 1], [], []>} : vector<8x128xbf16>, vector<128x384xbf16>, vector<8x384xf32> -> vector<8x384xf32>
    %49 = vector.extract_strided_slice %46 {offsets = [0, 0], sizes = [8, 128], strides = [1, 1]} : vector<8x384xf32> to vector<8x128xf32>
    %50 = vector.extract_strided_slice %48 {offsets = [0, 0], sizes = [8, 128], strides = [1, 1]} : vector<8x384xf32> to vector<8x128xf32>
    %51 = arith.addf %49, %50 : vector<8x128xf32>
    %52 = arith.negf %51 : vector<8x128xf32>
    %53 = math.exp %52 : vector<8x128xf32>
    %cst_21 = arith.constant 1.000000e+00 : f32
    %54 = vector.broadcast %cst_21 : f32 to vector<8x128xf32>
    %55 = arith.addf %54, %53 : vector<8x128xf32>
    %56 = arith.divf %54, %55 : vector<8x128xf32>
    %57 = vector.extract_strided_slice %46 {offsets = [0, 128], sizes = [8, 128], strides = [1, 1]} : vector<8x384xf32> to vector<8x128xf32>
    %58 = vector.extract_strided_slice %48 {offsets = [0, 128], sizes = [8, 128], strides = [1, 1]} : vector<8x384xf32> to vector<8x128xf32>
    %59 = arith.addf %57, %58 : vector<8x128xf32>
    %60 = arith.negf %59 : vector<8x128xf32>
    %61 = math.exp %60 : vector<8x128xf32>
    %cst_22 = arith.constant 1.000000e+00 : f32
    %62 = vector.broadcast %cst_22 : f32 to vector<8x128xf32>
    %63 = arith.addf %62, %61 : vector<8x128xf32>
    %64 = arith.divf %62, %63 : vector<8x128xf32>
    %65 = vector.extract_strided_slice %46 {offsets = [0, 256], sizes = [8, 128], strides = [1, 1]} : vector<8x384xf32> to vector<8x128xf32>
    %66 = vector.extract_strided_slice %48 {offsets = [0, 256], sizes = [8, 128], strides = [1, 1]} : vector<8x384xf32> to vector<8x128xf32>
    %67 = arith.addf %66, %8 : vector<8x128xf32>
    %68 = arith.mulf %56, %67 : vector<8x128xf32>
    %69 = arith.addf %65, %68 : vector<8x128xf32>
    %70 = math.tanh %69 : vector<8x128xf32>
    %71 = arith.subf %39, %70 : vector<8x128xf32>
    %72 = arith.mulf %64, %71 : vector<8x128xf32>
    %73 = arith.addf %70, %72 : vector<8x128xf32>
    %c0_23 = arith.constant 0 : index
    %74 = arith.index_cast %c1_i32 : i32 to index
    %c0_24 = arith.constant 0 : index
    %c0_25 = arith.constant 0 : index
    %75 = vector.load %arg5[%c0_23, %74, %c0_24, %c0_25] : memref<1x8x8x128xf32, #tpu.memory_space<vmem>>, vector<1x1x8x128xf32>
    %76 = vector.shape_cast %75 : vector<1x1x8x128xf32> to vector<8x128xf32>
    %77 = vector.shape_cast %73 : vector<8x128xf32> to vector<1x1x8x128xf32>
    tpu.vector_store %arg5[%c0_23, %74, %c0_24, %c0_25], %77 {strides = array<i32>} : memref<1x8x8x128xf32, #tpu.memory_space<vmem>>, vector<1x1x8x128xf32>,
    %c2_i32 = arith.constant 2 : i32
    %c0_26 = arith.constant 0 : index
    %78 = arith.index_cast %c2_i32 : i32 to index
    %c0_27 = arith.constant 0 : index
    %c0_28 = arith.constant 0 : index
    %79 = vector.load %arg2[%c0_26, %78, %c0_27, %c0_28] : memref<1x8x8x384xf32, #tpu.memory_space<vmem>>, vector<1x1x8x384xf32>
    %80 = vector.shape_cast %79 : vector<1x1x8x384xf32> to vector<8x384xf32>
    %81 = arith.truncf %73 : vector<8x128xf32> to vector<8x128xbf16>
    %cst_29 = arith.constant dense<0.000000e+00> : vector<8x384xf32>
    %82 = tpu.matmul %81, %4, %cst_29 {dimension_numbers = #tpu.dot_dimension_numbers<[1], [0], [0], [1], [0, 0, 1, 1], [], []>} : vector<8x128xbf16>, vector<128x384xbf16>, vector<8x384xf32> -> vector<8x384xf32>
    %83 = vector.extract_strided_slice %80 {offsets = [0, 0], sizes = [8, 128], strides = [1, 1]} : vector<8x384xf32> to vector<8x128xf32>
    %84 = vector.extract_strided_slice %82 {offsets = [0, 0], sizes = [8, 128], strides = [1, 1]} : vector<8x384xf32> to vector<8x128xf32>
    %85 = arith.addf %83, %84 : vector<8x128xf32>
    %86 = arith.negf %85 : vector<8x128xf32>
    %87 = math.exp %86 : vector<8x128xf32>
    %cst_30 = arith.constant 1.000000e+00 : f32
    %88 = vector.broadcast %cst_30 : f32 to vector<8x128xf32>
    %89 = arith.addf %88, %87 : vector<8x128xf32>
    %90 = arith.divf %88, %89 : vector<8x128xf32>
    %91 = vector.extract_strided_slice %80 {offsets = [0, 128], sizes = [8, 128], strides = [1, 1]} : vector<8x384xf32> to vector<8x128xf32>
    %92 = vector.extract_strided_slice %82 {offsets = [0, 128], sizes = [8, 128], strides = [1, 1]} : vector<8x384xf32> to vector<8x128xf32>
    %93 = arith.addf %91, %92 : vector<8x128xf32>
    %94 = arith.negf %93 : vector<8x128xf32>
    %95 = math.exp %94 : vector<8x128xf32>
    %cst_31 = arith.constant 1.000000e+00 : f32
    %96 = vector.broadcast %cst_31 : f32 to vector<8x128xf32>
    %97 = arith.addf %96, %95 : vector<8x128xf32>
    %98 = arith.divf %96, %97 : vector<8x128xf32>
    %99 = vector.extract_strided_slice %80 {offsets = [0, 256], sizes = [8, 128], strides = [1, 1]} : vector<8x384xf32> to vector<8x128xf32>
    %100 = vector.extract_strided_slice %82 {offsets = [0, 256], sizes = [8, 128], strides = [1, 1]} : vector<8x384xf32> to vector<8x128xf32>
    %101 = arith.addf %100, %8 : vector<8x128xf32>
    %102 = arith.mulf %90, %101 : vector<8x128xf32>
    %103 = arith.addf %99, %102 : vector<8x128xf32>
    %104 = math.tanh %103 : vector<8x128xf32>
    %105 = arith.subf %73, %104 : vector<8x128xf32>
    %106 = arith.mulf %98, %105 : vector<8x128xf32>
    %107 = arith.addf %104, %106 : vector<8x128xf32>
    %c0_32 = arith.constant 0 : index
    %108 = arith.index_cast %c2_i32 : i32 to index
    %c0_33 = arith.constant 0 : index
    %c0_34 = arith.constant 0 : index
    %109 = vector.load %arg5[%c0_32, %108, %c0_33, %c0_34] : memref<1x8x8x128xf32, #tpu.memory_space<vmem>>, vector<1x1x8x128xf32>
    %110 = vector.shape_cast %109 : vector<1x1x8x128xf32> to vector<8x128xf32>
    %111 = vector.shape_cast %107 : vector<8x128xf32> to vector<1x1x8x128xf32>
    tpu.vector_store %arg5[%c0_32, %108, %c0_33, %c0_34], %111 {strides = array<i32>} : memref<1x8x8x128xf32, #tpu.memory_space<vmem>>, vector<1x1x8x128xf32>,
    %c3_i32 = arith.constant 3 : i32
    %c0_35 = arith.constant 0 : index
    %112 = arith.index_cast %c3_i32 : i32 to index
    %c0_36 = arith.constant 0 : index
    %c0_37 = arith.constant 0 : index
    %113 = vector.load %arg2[%c0_35, %112, %c0_36, %c0_37] : memref<1x8x8x384xf32, #tpu.memory_space<vmem>>, vector<1x1x8x384xf32>
    %114 = vector.shape_cast %113 : vector<1x1x8x384xf32> to vector<8x384xf32>
    %115 = arith.truncf %107 : vector<8x128xf32> to vector<8x128xbf16>
    %cst_38 = arith.constant dense<0.000000e+00> : vector<8x384xf32>
    %116 = tpu.matmul %115, %4, %cst_38 {dimension_numbers = #tpu.dot_dimension_numbers<[1], [0], [0], [1], [0, 0, 1, 1], [], []>} : vector<8x128xbf16>, vector<128x384xbf16>, vector<8x384xf32> -> vector<8x384xf32>
    %117 = vector.extract_strided_slice %114 {offsets = [0, 0], sizes = [8, 128], strides = [1, 1]} : vector<8x384xf32> to vector<8x128xf32>
    %118 = vector.extract_strided_slice %116 {offsets = [0, 0], sizes = [8, 128], strides = [1, 1]} : vector<8x384xf32> to vector<8x128xf32>
    %119 = arith.addf %117, %118 : vector<8x128xf32>
    %120 = arith.negf %119 : vector<8x128xf32>
    %121 = math.exp %120 : vector<8x128xf32>
    %cst_39 = arith.constant 1.000000e+00 : f32
    %122 = vector.broadcast %cst_39 : f32 to vector<8x128xf32>
    %123 = arith.addf %122, %121 : vector<8x128xf32>
    %124 = arith.divf %122, %123 : vector<8x128xf32>
    %125 = vector.extract_strided_slice %114 {offsets = [0, 128], sizes = [8, 128], strides = [1, 1]} : vector<8x384xf32> to vector<8x128xf32>
    %126 = vector.extract_strided_slice %116 {offsets = [0, 128], sizes = [8, 128], strides = [1, 1]} : vector<8x384xf32> to vector<8x128xf32>
    %127 = arith.addf %125, %126 : vector<8x128xf32>
    %128 = arith.negf %127 : vector<8x128xf32>
    %129 = math.exp %128 : vector<8x128xf32>
    %cst_40 = arith.constant 1.000000e+00 : f32
    %130 = vector.broadcast %cst_40 : f32 to vector<8x128xf32>
    %131 = arith.addf %130, %129 : vector<8x128xf32>
    %132 = arith.divf %130, %131 : vector<8x128xf32>
    %133 = vector.extract_strided_slice %114 {offsets = [0, 256], sizes = [8, 128], strides = [1, 1]} : vector<8x384xf32> to vector<8x128xf32>
    %134 = vector.extract_strided_slice %116 {offsets = [0, 256], sizes = [8, 128], strides = [1, 1]} : vector<8x384xf32> to vector<8x128xf32>
    %135 = arith.addf %134, %8 : vector<8x128xf32>
    %136 = arith.mulf %124, %135 : vector<8x128xf32>
    %137 = arith.addf %133, %136 : vector<8x128xf32>
    %138 = math.tanh %137 : vector<8x128xf32>
    %139 = arith.subf %107, %138 : vector<8x128xf32>
    %140 = arith.mulf %132, %139 : vector<8x128xf32>
    %141 = arith.addf %138, %140 : vector<8x128xf32>
    %c0_41 = arith.constant 0 : index
    %142 = arith.index_cast %c3_i32 : i32 to index
    %c0_42 = arith.constant 0 : index
    %c0_43 = arith.constant 0 : index
    %143 = vector.load %arg5[%c0_41, %142, %c0_42, %c0_43] : memref<1x8x8x128xf32, #tpu.memory_space<vmem>>, vector<1x1x8x128xf32>
    %144 = vector.shape_cast %143 : vector<1x1x8x128xf32> to vector<8x128xf32>
    %145 = vector.shape_cast %141 : vector<8x128xf32> to vector<1x1x8x128xf32>
    tpu.vector_store %arg5[%c0_41, %142, %c0_42, %c0_43], %145 {strides = array<i32>} : memref<1x8x8x128xf32, #tpu.memory_space<vmem>>, vector<1x1x8x128xf32>,
    %c4_i32 = arith.constant 4 : i32
    %c0_44 = arith.constant 0 : index
    %146 = arith.index_cast %c4_i32 : i32 to index
    %c0_45 = arith.constant 0 : index
    %c0_46 = arith.constant 0 : index
    %147 = vector.load %arg2[%c0_44, %146, %c0_45, %c0_46] : memref<1x8x8x384xf32, #tpu.memory_space<vmem>>, vector<1x1x8x384xf32>
    %148 = vector.shape_cast %147 : vector<1x1x8x384xf32> to vector<8x384xf32>
    %149 = arith.truncf %141 : vector<8x128xf32> to vector<8x128xbf16>
    %cst_47 = arith.constant dense<0.000000e+00> : vector<8x384xf32>
    %150 = tpu.matmul %149, %4, %cst_47 {dimension_numbers = #tpu.dot_dimension_numbers<[1], [0], [0], [1], [0, 0, 1, 1], [], []>} : vector<8x128xbf16>, vector<128x384xbf16>, vector<8x384xf32> -> vector<8x384xf32>
    %151 = vector.extract_strided_slice %148 {offsets = [0, 0], sizes = [8, 128], strides = [1, 1]} : vector<8x384xf32> to vector<8x128xf32>
    %152 = vector.extract_strided_slice %150 {offsets = [0, 0], sizes = [8, 128], strides = [1, 1]} : vector<8x384xf32> to vector<8x128xf32>
    %153 = arith.addf %151, %152 : vector<8x128xf32>
    %154 = arith.negf %153 : vector<8x128xf32>
    %155 = math.exp %154 : vector<8x128xf32>
    %cst_48 = arith.constant 1.000000e+00 : f32
    %156 = vector.broadcast %cst_48 : f32 to vector<8x128xf32>
    %157 = arith.addf %156, %155 : vector<8x128xf32>
    %158 = arith.divf %156, %157 : vector<8x128xf32>
    %159 = vector.extract_strided_slice %148 {offsets = [0, 128], sizes = [8, 128], strides = [1, 1]} : vector<8x384xf32> to vector<8x128xf32>
    %160 = vector.extract_strided_slice %150 {offsets = [0, 128], sizes = [8, 128], strides = [1, 1]} : vector<8x384xf32> to vector<8x128xf32>
    %161 = arith.addf %159, %160 : vector<8x128xf32>
    %162 = arith.negf %161 : vector<8x128xf32>
    %163 = math.exp %162 : vector<8x128xf32>
    %cst_49 = arith.constant 1.000000e+00 : f32
    %164 = vector.broadcast %cst_49 : f32 to vector<8x128xf32>
    %165 = arith.addf %164, %163 : vector<8x128xf32>
    %166 = arith.divf %164, %165 : vector<8x128xf32>
    %167 = vector.extract_strided_slice %148 {offsets = [0, 256], sizes = [8, 128], strides = [1, 1]} : vector<8x384xf32> to vector<8x128xf32>
    %168 = vector.extract_strided_slice %150 {offsets = [0, 256], sizes = [8, 128], strides = [1, 1]} : vector<8x384xf32> to vector<8x128xf32>
    %169 = arith.addf %168, %8 : vector<8x128xf32>
    %170 = arith.mulf %158, %169 : vector<8x128xf32>
    %171 = arith.addf %167, %170 : vector<8x128xf32>
    %172 = math.tanh %171 : vector<8x128xf32>
    %173 = arith.subf %141, %172 : vector<8x128xf32>
    %174 = arith.mulf %166, %173 : vector<8x128xf32>
    %175 = arith.addf %172, %174 : vector<8x128xf32>
    %c0_50 = arith.constant 0 : index
    %176 = arith.index_cast %c4_i32 : i32 to index
    %c0_51 = arith.constant 0 : index
    %c0_52 = arith.constant 0 : index
    %177 = vector.load %arg5[%c0_50, %176, %c0_51, %c0_52] : memref<1x8x8x128xf32, #tpu.memory_space<vmem>>, vector<1x1x8x128xf32>
    %178 = vector.shape_cast %177 : vector<1x1x8x128xf32> to vector<8x128xf32>
    %179 = vector.shape_cast %175 : vector<8x128xf32> to vector<1x1x8x128xf32>
    tpu.vector_store %arg5[%c0_50, %176, %c0_51, %c0_52], %179 {strides = array<i32>} : memref<1x8x8x128xf32, #tpu.memory_space<vmem>>, vector<1x1x8x128xf32>,
    %c5_i32 = arith.constant 5 : i32
    %c0_53 = arith.constant 0 : index
    %180 = arith.index_cast %c5_i32 : i32 to index
    %c0_54 = arith.constant 0 : index
    %c0_55 = arith.constant 0 : index
    %181 = vector.load %arg2[%c0_53, %180, %c0_54, %c0_55] : memref<1x8x8x384xf32, #tpu.memory_space<vmem>>, vector<1x1x8x384xf32>
    %182 = vector.shape_cast %181 : vector<1x1x8x384xf32> to vector<8x384xf32>
    %183 = arith.truncf %175 : vector<8x128xf32> to vector<8x128xbf16>
    %cst_56 = arith.constant dense<0.000000e+00> : vector<8x384xf32>
    %184 = tpu.matmul %183, %4, %cst_56 {dimension_numbers = #tpu.dot_dimension_numbers<[1], [0], [0], [1], [0, 0, 1, 1], [], []>} : vector<8x128xbf16>, vector<128x384xbf16>, vector<8x384xf32> -> vector<8x384xf32>
    %185 = vector.extract_strided_slice %182 {offsets = [0, 0], sizes = [8, 128], strides = [1, 1]} : vector<8x384xf32> to vector<8x128xf32>
    %186 = vector.extract_strided_slice %184 {offsets = [0, 0], sizes = [8, 128], strides = [1, 1]} : vector<8x384xf32> to vector<8x128xf32>
    %187 = arith.addf %185, %186 : vector<8x128xf32>
    %188 = arith.negf %187 : vector<8x128xf32>
    %189 = math.exp %188 : vector<8x128xf32>
    %cst_57 = arith.constant 1.000000e+00 : f32
    %190 = vector.broadcast %cst_57 : f32 to vector<8x128xf32>
    %191 = arith.addf %190, %189 : vector<8x128xf32>
    %192 = arith.divf %190, %191 : vector<8x128xf32>
    %193 = vector.extract_strided_slice %182 {offsets = [0, 128], sizes = [8, 128], strides = [1, 1]} : vector<8x384xf32> to vector<8x128xf32>
    %194 = vector.extract_strided_slice %184 {offsets = [0, 128], sizes = [8, 128], strides = [1, 1]} : vector<8x384xf32> to vector<8x128xf32>
    %195 = arith.addf %193, %194 : vector<8x128xf32>
    %196 = arith.negf %195 : vector<8x128xf32>
    %197 = math.exp %196 : vector<8x128xf32>
    %cst_58 = arith.constant 1.000000e+00 : f32
    %198 = vector.broadcast %cst_58 : f32 to vector<8x128xf32>
    %199 = arith.addf %198, %197 : vector<8x128xf32>
    %200 = arith.divf %198, %199 : vector<8x128xf32>
    %201 = vector.extract_strided_slice %182 {offsets = [0, 256], sizes = [8, 128], strides = [1, 1]} : vector<8x384xf32> to vector<8x128xf32>
    %202 = vector.extract_strided_slice %184 {offsets = [0, 256], sizes = [8, 128], strides = [1, 1]} : vector<8x384xf32> to vector<8x128xf32>
    %203 = arith.addf %202, %8 : vector<8x128xf32>
    %204 = arith.mulf %192, %203 : vector<8x128xf32>
    %205 = arith.addf %201, %204 : vector<8x128xf32>
    %206 = math.tanh %205 : vector<8x128xf32>
    %207 = arith.subf %175, %206 : vector<8x128xf32>
    %208 = arith.mulf %200, %207 : vector<8x128xf32>
    %209 = arith.addf %206, %208 : vector<8x128xf32>
    %c0_59 = arith.constant 0 : index
    %210 = arith.index_cast %c5_i32 : i32 to index
    %c0_60 = arith.constant 0 : index
    %c0_61 = arith.constant 0 : index
    %211 = vector.load %arg5[%c0_59, %210, %c0_60, %c0_61] : memref<1x8x8x128xf32, #tpu.memory_space<vmem>>, vector<1x1x8x128xf32>
    %212 = vector.shape_cast %211 : vector<1x1x8x128xf32> to vector<8x128xf32>
    %213 = vector.shape_cast %209 : vector<8x128xf32> to vector<1x1x8x128xf32>
    tpu.vector_store %arg5[%c0_59, %210, %c0_60, %c0_61], %213 {strides = array<i32>} : memref<1x8x8x128xf32, #tpu.memory_space<vmem>>, vector<1x1x8x128xf32>,
    %c6_i32 = arith.constant 6 : i32
    %c0_62 = arith.constant 0 : index
    %214 = arith.index_cast %c6_i32 : i32 to index
    %c0_63 = arith.constant 0 : index
    %c0_64 = arith.constant 0 : index
    %215 = vector.load %arg2[%c0_62, %214, %c0_63, %c0_64] : memref<1x8x8x384xf32, #tpu.memory_space<vmem>>, vector<1x1x8x384xf32>
    %216 = vector.shape_cast %215 : vector<1x1x8x384xf32> to vector<8x384xf32>
    %217 = arith.truncf %209 : vector<8x128xf32> to vector<8x128xbf16>
    %cst_65 = arith.constant dense<0.000000e+00> : vector<8x384xf32>
    %218 = tpu.matmul %217, %4, %cst_65 {dimension_numbers = #tpu.dot_dimension_numbers<[1], [0], [0], [1], [0, 0, 1, 1], [], []>} : vector<8x128xbf16>, vector<128x384xbf16>, vector<8x384xf32> -> vector<8x384xf32>
    %219 = vector.extract_strided_slice %216 {offsets = [0, 0], sizes = [8, 128], strides = [1, 1]} : vector<8x384xf32> to vector<8x128xf32>
    %220 = vector.extract_strided_slice %218 {offsets = [0, 0], sizes = [8, 128], strides = [1, 1]} : vector<8x384xf32> to vector<8x128xf32>
    %221 = arith.addf %219, %220 : vector<8x128xf32>
    %222 = arith.negf %221 : vector<8x128xf32>
    %223 = math.exp %222 : vector<8x128xf32>
    %cst_66 = arith.constant 1.000000e+00 : f32
    %224 = vector.broadcast %cst_66 : f32 to vector<8x128xf32>
    %225 = arith.addf %224, %223 : vector<8x128xf32>
    %226 = arith.divf %224, %225 : vector<8x128xf32>
    %227 = vector.extract_strided_slice %216 {offsets = [0, 128], sizes = [8, 128], strides = [1, 1]} : vector<8x384xf32> to vector<8x128xf32>
    %228 = vector.extract_strided_slice %218 {offsets = [0, 128], sizes = [8, 128], strides = [1, 1]} : vector<8x384xf32> to vector<8x128xf32>
    %229 = arith.addf %227, %228 : vector<8x128xf32>
    %230 = arith.negf %229 : vector<8x128xf32>
    %231 = math.exp %230 : vector<8x128xf32>
    %cst_67 = arith.constant 1.000000e+00 : f32
    %232 = vector.broadcast %cst_67 : f32 to vector<8x128xf32>
    %233 = arith.addf %232, %231 : vector<8x128xf32>
    %234 = arith.divf %232, %233 : vector<8x128xf32>
    %235 = vector.extract_strided_slice %216 {offsets = [0, 256], sizes = [8, 128], strides = [1, 1]} : vector<8x384xf32> to vector<8x128xf32>
    %236 = vector.extract_strided_slice %218 {offsets = [0, 256], sizes = [8, 128], strides = [1, 1]} : vector<8x384xf32> to vector<8x128xf32>
    %237 = arith.addf %236, %8 : vector<8x128xf32>
    %238 = arith.mulf %226, %237 : vector<8x128xf32>
    %239 = arith.addf %235, %238 : vector<8x128xf32>
    %240 = math.tanh %239 : vector<8x128xf32>
    %241 = arith.subf %209, %240 : vector<8x128xf32>
    %242 = arith.mulf %234, %241 : vector<8x128xf32>
    %243 = arith.addf %240, %242 : vector<8x128xf32>
    %c0_68 = arith.constant 0 : index
    %244 = arith.index_cast %c6_i32 : i32 to index
    %c0_69 = arith.constant 0 : index
    %c0_70 = arith.constant 0 : index
    %245 = vector.load %arg5[%c0_68, %244, %c0_69, %c0_70] : memref<1x8x8x128xf32, #tpu.memory_space<vmem>>, vector<1x1x8x128xf32>
    %246 = vector.shape_cast %245 : vector<1x1x8x128xf32> to vector<8x128xf32>
    %247 = vector.shape_cast %243 : vector<8x128xf32> to vector<1x1x8x128xf32>
    tpu.vector_store %arg5[%c0_68, %244, %c0_69, %c0_70], %247 {strides = array<i32>} : memref<1x8x8x128xf32, #tpu.memory_space<vmem>>, vector<1x1x8x128xf32>,
    %c7_i32 = arith.constant 7 : i32
    %c0_71 = arith.constant 0 : index
    %248 = arith.index_cast %c7_i32 : i32 to index
    %c0_72 = arith.constant 0 : index
    %c0_73 = arith.constant 0 : index
    %249 = vector.load %arg2[%c0_71, %248, %c0_72, %c0_73] : memref<1x8x8x384xf32, #tpu.memory_space<vmem>>, vector<1x1x8x384xf32>
    %250 = vector.shape_cast %249 : vector<1x1x8x384xf32> to vector<8x384xf32>
    %251 = arith.truncf %243 : vector<8x128xf32> to vector<8x128xbf16>
    %cst_74 = arith.constant dense<0.000000e+00> : vector<8x384xf32>
    %252 = tpu.matmul %251, %4, %cst_74 {dimension_numbers = #tpu.dot_dimension_numbers<[1], [0], [0], [1], [0, 0, 1, 1], [], []>} : vector<8x128xbf16>, vector<128x384xbf16>, vector<8x384xf32> -> vector<8x384xf32>
    %253 = vector.extract_strided_slice %250 {offsets = [0, 0], sizes = [8, 128], strides = [1, 1]} : vector<8x384xf32> to vector<8x128xf32>
    %254 = vector.extract_strided_slice %252 {offsets = [0, 0], sizes = [8, 128], strides = [1, 1]} : vector<8x384xf32> to vector<8x128xf32>
    %255 = arith.addf %253, %254 : vector<8x128xf32>
    %256 = arith.negf %255 : vector<8x128xf32>
    %257 = math.exp %256 : vector<8x128xf32>
    %cst_75 = arith.constant 1.000000e+00 : f32
    %258 = vector.broadcast %cst_75 : f32 to vector<8x128xf32>
    %259 = arith.addf %258, %257 : vector<8x128xf32>
    %260 = arith.divf %258, %259 : vector<8x128xf32>
    %261 = vector.extract_strided_slice %250 {offsets = [0, 128], sizes = [8, 128], strides = [1, 1]} : vector<8x384xf32> to vector<8x128xf32>
    %262 = vector.extract_strided_slice %252 {offsets = [0, 128], sizes = [8, 128], strides = [1, 1]} : vector<8x384xf32> to vector<8x128xf32>
    %263 = arith.addf %261, %262 : vector<8x128xf32>
    %264 = arith.negf %263 : vector<8x128xf32>
    %265 = math.exp %264 : vector<8x128xf32>
    %cst_76 = arith.constant 1.000000e+00 : f32
    %266 = vector.broadcast %cst_76 : f32 to vector<8x128xf32>
    %267 = arith.addf %266, %265 : vector<8x128xf32>
    %268 = arith.divf %266, %267 : vector<8x128xf32>
    %269 = vector.extract_strided_slice %250 {offsets = [0, 256], sizes = [8, 128], strides = [1, 1]} : vector<8x384xf32> to vector<8x128xf32>
    %270 = vector.extract_strided_slice %252 {offsets = [0, 256], sizes = [8, 128], strides = [1, 1]} : vector<8x384xf32> to vector<8x128xf32>
    %271 = arith.addf %270, %8 : vector<8x128xf32>
    %272 = arith.mulf %260, %271 : vector<8x128xf32>
    %273 = arith.addf %269, %272 : vector<8x128xf32>
    %274 = math.tanh %273 : vector<8x128xf32>
    %275 = arith.subf %243, %274 : vector<8x128xf32>
    %276 = arith.mulf %268, %275 : vector<8x128xf32>
    %277 = arith.addf %274, %276 : vector<8x128xf32>
    %c0_77 = arith.constant 0 : index
    %278 = arith.index_cast %c7_i32 : i32 to index
    %c0_78 = arith.constant 0 : index
    %c0_79 = arith.constant 0 : index
    %279 = vector.load %arg5[%c0_77, %278, %c0_78, %c0_79] : memref<1x8x8x128xf32, #tpu.memory_space<vmem>>, vector<1x1x8x128xf32>
    %280 = vector.shape_cast %279 : vector<1x1x8x128xf32> to vector<8x128xf32>
    %281 = vector.shape_cast %277 : vector<8x128xf32> to vector<1x1x8x128xf32>
    tpu.vector_store %arg5[%c0_77, %278, %c0_78, %c0_79], %281 {strides = array<i32>} : memref<1x8x8x128xf32, #tpu.memory_space<vmem>>, vector<1x1x8x128xf32>,
    %c8_i32 = arith.constant 8 : i32
    %c0_80 = arith.constant 0 : index
    %c0_81 = arith.constant 0 : index
    %282 = vector.load %arg6[%c0_80, %c0_81] : memref<8x128xf32, #tpu.memory_space<vmem>>, vector<8x128xf32>
    tpu.vector_store %arg6[%c0_80, %c0_81], %277 {strides = array<i32>} : memref<8x128xf32, #tpu.memory_space<vmem>>, vector<8x128xf32>,
    return
  }
  func.func @transform_0(%arg0: i32, %arg1: i32) -> (i32, i32, i32, i32) {
    %c0_i32 = arith.constant 0 : i32
    %c0_i32_0 = arith.constant 0 : i32
    %c0_i32_1 = arith.constant 0 : i32
    return %arg0, %arg1, %c0_i32, %c0_i32_0 : i32, i32, i32, i32
  }
  func.func @transform_1(%arg0: i32, %arg1: i32) -> (i32, i32, i32) {
    %c0_i32 = arith.constant 0 : i32
    %c0_i32_0 = arith.constant 0 : i32
    %c0_i32_1 = arith.constant 0 : i32
    return %arg0, %c0_i32, %c0_i32_0 : i32, i32, i32
  }
  func.func @transform_2(%arg0: i32, %arg1: i32) -> (i32, i32, i32) {
    %c0_i32 = arith.constant 0 : i32
    %c0_i32_0 = arith.constant 0 : i32
    %c0_i32_1 = arith.constant 0 : i32
    return %arg0, %c0_i32, %c0_i32_0 : i32, i32, i32
  }
  func.func @transform_3(%arg0: i32, %arg1: i32) -> (i32, i32, i32, i32) {
    %c0_i32 = arith.constant 0 : i32
    %c0_i32_0 = arith.constant 0 : i32
    %c0_i32_1 = arith.constant 0 : i32
    return %arg0, %arg1, %c0_i32, %c0_i32_0 : i32, i32, i32, i32
  }
}

</mosaic_0001>

<llo_original>
// kernel: tpu_custom_call.1
$region0: #{tpu_custom_call.1}
  #allocation0 [shape = 'u32[]', space=smem, size = 0x4, offset = 0x4, fixed_abs, tag = 'smem constant byte address 0x4 - core index']
  #allocation1 [shape = 'u32[72,128]{1,0:T(1,128)}', space=vmem, size = 0x9000, scoped, tag = 'internal scratch']
  #allocation2 [shape = 'f32[8,128]{1,0:T(8,128)}', space=vmem, size = 0x1000, scoped, tag = 'scratch operand']
  %s0 = inlined_call_operand.hbm [shape: f32[2,8,8,384], index: 0, kind: input, shape index: {}]
  %s1 = inlined_call_operand.hbm [shape: bf16[2,128,384], index: 1, kind: input, shape index: {}]
  %s2 = inlined_call_operand.hbm [shape: f32[2,1,128], index: 2, kind: input, shape index: {}]
  %s3 = inlined_call_operand.hbm [shape: f32[2,8,8,128], index: 3, kind: output, shape index: {}]
  %s4 = sld [smem:[#allocation0]]
  $region61: #{tpu_custom_call.1} parent=0
    _
  %s6 = ssub.s32 1, %s4
  %s7 = scalar_select 0, %s6, %s4
  $region1: #{tpu_custom_call.1} parent=0
    #allocation3 [shape = 'u8[196608]{0}', space=vmem, size = 0x30000, scoped, tag = 'input window, operand 0']
    #allocation4 [shape = 's32[2]{0}', space=sflag, size = 0x8, scoped, tag = 'scoped memory for tpu_custom_call.1']
    #allocation5 [shape = 's32[2]{0}', space=sflag, size = 0x8, scoped, tag = 'scoped memory for tpu_custom_call.1']
    #allocation6 [shape = 'u8[196608]{0}', space=vmem, size = 0x30000, scoped, tag = 'input window, operand 1']
    #allocation7 [shape = 's32[2]{0}', space=sflag, size = 0x8, scoped, tag = 'scoped memory for tpu_custom_call.1']
    #allocation8 [shape = 'u8[1024]{0}', space=vmem, size = 0x400, scoped, tag = 'input window, operand 2']
    #allocation9 [shape = 'u8[65536]{0}', space=vmem, size = 0x10000, scoped, tag = 'output window, operand 0']
    %8 = vsyncpa [#allocation4], 0
    %s9 = scalar_lea.sflag [#allocation4], 1
    %10 = vsyncpa %s9, 0
    %11 = vsyncpa [#allocation7], 0
    %s12 = scalar_lea.sflag [#allocation7], 1
    %13 = vsyncpa %s12, 0
    %14 = vsyncpa [#allocation5], 0
    %s15 = scalar_lea.sflag [#allocation5], 1
    %16 = vsyncpa %s15, 0
    loop: start=0, step=1, limit=4
    $region2: #{tpu_custom_call.1} parent=1 // loop_pre_header
      _
    $region3: #{tpu_custom_call.1} parent=1 // loop_header
      %s18 = sphi 0, %s22
      %p19 = scmp.ge.s32.totalorder %s18, 4
      %s25 = sphi 0, %s37
      %s26 = sphi 0, %s33
      %s27 = sphi 0, %s25
      %s28 = sphi 0, %s26
      %s29 = sphi 0, %s27
      %s30 = sphi 0, %s28
      %s42 = sphi 0, %s44
      %s45 = sphi 0, %s42
      %s46 = sphi 0, %s45
      %s62 = sphi 0, %s46
      %s68 = sphi 0, %s70
      %s71 = sphi 0, %s68
      %s72 = sphi 0, %s71
      %s88 = sphi 0, %s72
      %s94 = sphi 0, %s96
      %s97 = sphi 0, %s94
      %s98 = sphi 0, %s97
      %s114 = sphi 0, %s98
      %s122 = sphi 0, %s124
      %s125 = sphi 0, %s122
      %s126 = sphi 0, %s125
      %s142 = sphi 0, %s126
    $region4: #{tpu_custom_call.1} parent=1 // loop_header_branch
      %21 = sbr.rel (%p19) target = $region8
    $region5: #{tpu_custom_call.1} parent=1 // loop_body
      %s23 = ssub.s32 %s18, 1
      %s24 = ssub.s32 %s18, 2
      %s31 = sadd.s32 1, %s26
      %p32 = scmp.ge.s32.totalorder %s31, 1
      %s33 = scalar_select %p32, 0, %s31
      %s34 = sadd.s32 1, %s25
      %s35 = scalar_select %p32, %s34, %s25
      %p36 = scmp.ge.s32.totalorder %s35, 2
      %s37 = scalar_select %p36, 0, %s35
      %s38 = ssub.s32 %s25, %s37
      %s39 = ssub.s32 %s26, %s33
      %s40 = sor.u32 %s38, %s39
      %p41 = scmp.eq.s32.totalorder %s40, 0
      %s43 = sadd.s32 %s42, 1
      %s44 = scalar_select %p41, %s42, %s43
      %p47 = pneg %p41
      %p48 = scmp.eq.s32.totalorder %s18, 1
      %p49 = por %p47, %p48
      %p50 = scmp.ne.s32.totalorder %s42, %s45
      %p51 = scmp.eq.s32.totalorder %s18, 0
      %p52 = por %p50, %p51
      %p53 = scmp.ne.s32.totalorder %s42, %s45
      %p54 = scmp.eq.s32.totalorder %s23, 1
      %p55 = por %p53, %p54
      %p56 = scmp.ne.s32.totalorder %s45, %s46
      %p57 = scmp.eq.s32.totalorder %s23, 0
      %p58 = por %p56, %p57
      %p59 = scmp.ne.s32.totalorder %s45, %s46
      %p60 = scmp.eq.s32.totalorder %s24, 1
      %p61 = por %p59, %p60
      %p63 = scmp.ne.s32.totalorder %s46, %s62
      %p64 = scmp.eq.s32.totalorder %s24, 0
      %p65 = por %p63, %p64
      %s66 = ssub.s32 %s25, %s37
      %p67 = scmp.eq.s32.totalorder %s66, 0
      %s69 = sadd.s32 %s68, 1
      %s70 = scalar_select %p67, %s68, %s69
      %p73 = pneg %p67
      %p74 = scmp.eq.s32.totalorder %s18, 1
      %p75 = por %p73, %p74
      %p76 = scmp.ne.s32.totalorder %s68, %s71
      %p77 = scmp.eq.s32.totalorder %s18, 0
      %p78 = por %p76, %p77
      %p79 = scmp.ne.s32.totalorder %s68, %s71
      %p80 = scmp.eq.s32.totalorder %s23, 1
      %p81 = por %p79, %p80
      %p82 = scmp.ne.s32.totalorder %s71, %s72
      %p83 = scmp.eq.s32.totalorder %s23, 0
      %p84 = por %p82, %p83
      %p85 = scmp.ne.s32.totalorder %s71, %s72
      %p86 = scmp.eq.s32.totalorder %s24, 1
      %p87 = por %p85, %p86
      %p89 = scmp.ne.s32.totalorder %s72, %s88
      %p90 = scmp.eq.s32.totalorder %s24, 0
      %p91 = por %p89, %p90
      %s92 = ssub.s32 %s25, %s37
      %p93 = scmp.eq.s32.totalorder %s92, 0
      %s95 = sadd.s32 %s94, 1
      %s96 = scalar_select %p93, %s94, %s95
      %p99 = pneg %p93
      %p100 = scmp.eq.s32.totalorder %s18, 1
      %p101 = por %p99, %p100
      %p102 = scmp.ne.s32.totalorder %s94, %s97
      %p103 = scmp.eq.s32.totalorder %s18, 0
      %p104 = por %p102, %p103
      %p105 = scmp.ne.s32.totalorder %s94, %s97
      %p106 = scmp.eq.s32.totalorder %s23, 1
      %p107 = por %p105, %p106
      %p108 = scmp.ne.s32.totalorder %s97, %s98
      %p109 = scmp.eq.s32.totalorder %s23, 0
      %p110 = por %p108, %p109
      %p111 = scmp.ne.s32.totalorder %s97, %s98
      %p112 = scmp.eq.s32.totalorder %s24, 1
      %p113 = por %p111, %p112
      %p115 = scmp.ne.s32.totalorder %s98, %s114
      %p116 = scmp.eq.s32.totalorder %s24, 0
      %p117 = por %p115, %p116
      %s118 = ssub.s32 %s25, %s37
      %s119 = ssub.s32 %s26, %s33
      %s120 = sor.u32 %s118, %s119
      %p121 = scmp.eq.s32.totalorder %s120, 0
      %s123 = sadd.s32 %s122, 1
      %s124 = scalar_select %p121, %s122, %s123
      %p127 = pneg %p121
      %p128 = scmp.eq.s32.totalorder %s18, 1
      %p129 = por %p127, %p128
      %p130 = scmp.ne.s32.totalorder %s122, %s125
      %p131 = scmp.eq.s32.totalorder %s18, 0
      %p132 = por %p130, %p131
      %p133 = scmp.ne.s32.totalorder %s122, %s125
      %p134 = scmp.eq.s32.totalorder %s23, 1
      %p135 = por %p133, %p134
      %p136 = scmp.ne.s32.totalorder %s125, %s126
      %p137 = scmp.eq.s32.totalorder %s23, 0
      %p138 = por %p136, %p137
      %p139 = scmp.ne.s32.totalorder %s125, %s126
      %p140 = scmp.eq.s32.totalorder %s24, 1
      %p141 = por %p139, %p140
      %p143 = scmp.ne.s32.totalorder %s126, %s142
      %p144 = scmp.eq.s32.totalorder %s24, 0
      %p145 = por %p143, %p144
      %p146 = scmp.le.s32.totalorder 1, %s18
      %p147 = scmp.lt.s32.totalorder %s18, 3
      %p148 = pnand %p146, %p147
      %p149 = pneg %p148
      // Predicated region
      $region9: #{tpu_custom_call.1} parent=5 // pred_check
        _
      $region10: #{tpu_custom_call.1} parent=5 // pred_check_branch
        %151 = sbr.rel (%p148) target = $region12
      $region11: #{tpu_custom_call.1} parent=5 // pred_region
        %s152 = ssub.s32 %s18, 1
      $region12: #{tpu_custom_call.1} parent=5 // pred_fallthru
        _
      %p153 = scmp.lt.s32.totalorder %s18, 2
      // Predicated region
      $region13: #{tpu_custom_call.1} parent=5 // pred_check
        %p154 = pneg %p153
      $region14: #{tpu_custom_call.1} parent=5 // pred_check_branch
        %156 = sbr.rel (%p154) target = $region16
      $region15: #{tpu_custom_call.1} parent=5 // pred_region
        // Predicated region
        $region17: #{tpu_custom_call.1} parent=15 // pred_check
          %p157 = pneg %p52
        $region18: #{tpu_custom_call.1} parent=15 // pred_check_branch
          %159 = sbr.rel (%p157) target = $region20
        $region19: #{tpu_custom_call.1} parent=15 // pred_region
          %s160 = sand.u32 %s42, 1
          %s161 = scalar_lea.sflag [#allocation4], %s160
          %s162 = sand.u32 %s42, 1
          %s163 = smul.addr %s162, 192
          %s164 = scalar_lea.vmem [#allocation3], %s163
          %s165 = smul.u32 8, %s26
          %167 = vsyncadd %s161, 0
          %s168 = smul.addr %s165, 3
          %s169 = smul.addr %s25, 24
          %s170 = sadd.s32 %s168, %s169
          %s171 = smul.addr %s170, 8
          %s172 = scalar_lea.hbm %s0, %s171
          %s173 = sshll.u32 %s172, 4
          %s174 = int_to_ptr.hbm [resolvable:$true] %s173
          %s175 = sshll.u32 %s164, 4
          %s176 = int_to_ptr.vmem [resolvable:$true] %s175
          %181 = dma.hbm_to_vmem [thread:$0]  %s174, 3072, %s176, %s161, 384, 384, 24
        $region20: #{tpu_custom_call.1} parent=15 // pred_fallthru
          _
        // Predicated region
        $region21: #{tpu_custom_call.1} parent=15 // pred_check
          %p182 = pneg %p78
        $region22: #{tpu_custom_call.1} parent=15 // pred_check_branch
          %184 = sbr.rel (%p182) target = $region24
        $region23: #{tpu_custom_call.1} parent=15 // pred_region
          %s185 = sand.u32 %s18, 1
          %s186 = scalar_lea.sflag [#allocation7], %s185
          %s187 = sand.u32 %s68, 1
          %s188 = smul.addr %s187, 192
          %s189 = scalar_lea.vmem [#allocation6], %s188
          %191 = vsyncadd %s186, 0
          %s192 = smul.addr %s25, 48
          %s193 = smul.addr %s192, 4
          %s194 = scalar_lea.hbm %s1, %s193
          %s195 = sshll.u32 %s194, 4
          %s196 = int_to_ptr.hbm [resolvable:$true] %s195
          %s197 = sshll.u32 %s189, 4
          %s198 = int_to_ptr.vmem [resolvable:$true] %s197
          %203 = dma.hbm_to_vmem [thread:$0]  %s196, 3072, %s198, %s186, 192, 192, 12
        $region24: #{tpu_custom_call.1} parent=15 // pred_fallthru
          _
        // Predicated region
        $region25: #{tpu_custom_call.1} parent=15 // pred_check
          %p204 = pneg %p104
        $region26: #{tpu_custom_call.1} parent=15 // pred_check_branch
          %206 = sbr.rel (%p204) target = $region28
        $region27: #{tpu_custom_call.1} parent=15 // pred_region
          %s207 = sand.u32 %s18, 1
          %s208 = scalar_lea.sflag [#allocation7], %s207
          %s209 = sand.u32 %s94, 1
          %s210 = scalar_lea.vmem [#allocation8], %s209
          %212 = vsyncadd %s208, 0
          %s213 = scalar_lea.hbm %s2, %s25
          %s215 = sshll.u32 %s213, 4
          %s216 = int_to_ptr.hbm [resolvable:$true] %s215
          %s217 = sshll.u32 %s210, 4
          %s218 = int_to_ptr.vmem [resolvable:$true] %s217
          %220 = dma.hbm_to_vmem [thread:$0]  %s216, 16, %s218, %s208
        $region28: #{tpu_custom_call.1} parent=15 // pred_fallthru
          _
      $region16: #{tpu_custom_call.1} parent=5 // pred_fallthru
        _
      %p221 = scmp.le.s32.totalorder 1, %s18
      %p222 = scmp.lt.s32.totalorder %s18, 3
      %p223 = pnand %p221, %p222
      %p224 = pneg %p223
      // Predicated region
      $region29: #{tpu_custom_call.1} parent=5 // pred_check
        _
      $region30: #{tpu_custom_call.1} parent=5 // pred_check_branch
        %226 = sbr.rel (%p223) target = $region32
      $region31: #{tpu_custom_call.1} parent=5 // pred_region
        %s227 = ssub.s32 %s18, 1
        %s228 = sand.u32 %s45, 1
        %s229 = scalar_lea.sflag [#allocation4], %s228
        %s230 = sand.u32 %s45, 1
        %s231 = smul.addr %s230, 192
        %s232 = scalar_lea.vmem [#allocation3], %s231
        // Predicated region
        $region33: #{tpu_custom_call.1} parent=31 // pred_check
          %p233 = pneg %p58
        $region34: #{tpu_custom_call.1} parent=31 // pred_check_branch
          %235 = sbr.rel (%p233) target = $region36
        $region35: #{tpu_custom_call.1} parent=31 // pred_region
          %237 = dma.done %s229, 3072
        $region36: #{tpu_custom_call.1} parent=31 // pred_fallthru
          _
        %s238 = sand.u32 %s23, 1
        %s239 = scalar_lea.sflag [#allocation7], %s238
        %s240 = sand.u32 %s71, 1
        %s241 = smul.addr %s240, 192
        %s242 = scalar_lea.vmem [#allocation6], %s241
        // Predicated region
        $region37: #{tpu_custom_call.1} parent=31 // pred_check
          %p243 = pneg %p84
        $region38: #{tpu_custom_call.1} parent=31 // pred_check_branch
          %245 = sbr.rel (%p243) target = $region40
        $region39: #{tpu_custom_call.1} parent=31 // pred_region
          %247 = dma.done %s239, 3072
        $region40: #{tpu_custom_call.1} parent=31 // pred_fallthru
          _
        %s248 = sand.u32 %s23, 1
        %s249 = scalar_lea.sflag [#allocation7], %s248
        %s250 = sand.u32 %s97, 1
        %s251 = scalar_lea.vmem [#allocation8], %s250
        // Predicated region
        $region41: #{tpu_custom_call.1} parent=31 // pred_check
          %p252 = pneg %p110
        $region42: #{tpu_custom_call.1} parent=31 // pred_check_branch
          %254 = sbr.rel (%p252) target = $region44
        $region43: #{tpu_custom_call.1} parent=31 // pred_region
          %256 = dma.done %s249, 16
        $region44: #{tpu_custom_call.1} parent=31 // pred_fallthru
          _
        %s257 = sand.u32 %s45, 1
        %s258 = scalar_lea.sflag [#allocation4], %s257
        %s259 = sand.u32 %s45, 1
        %s260 = smul.addr %s259, 192
        %s261 = scalar_lea.vmem [#allocation3], %s260
        %p262 = pneg %p58
        %p263 = pneg %p55
        %s264 = sand.u32 %s23, 1
        %s265 = scalar_lea.sflag [#allocation7], %s264
        %s266 = sand.u32 %s71, 1
        %s267 = smul.addr %s266, 192
        %s268 = scalar_lea.vmem [#allocation6], %s267
        %p269 = pneg %p84
        %p270 = pneg %p81
        %s271 = sand.u32 %s23, 1
        %s272 = scalar_lea.sflag [#allocation7], %s271
        %s273 = sand.u32 %s97, 1
        %s274 = scalar_lea.vmem [#allocation8], %s273
        %p275 = pneg %p110
        %p276 = pneg %p107
        %p277 = pneg %p138
        %p278 = pneg %p135
        %s279 = sand.u32 %s125, 1
        %s280 = scalar_lea.sflag [#allocation5], %s279
        %s281 = sand.u32 %s125, 1
        %s282 = smul.addr %s281, 64
        %s283 = scalar_lea.vmem [#allocation9], %s282
        %s284 = smul.u32 8, %s28
        %s285 = smul.u32 8, %s28
        %p286 = scmp.eq.s32.totalorder %s28, 0
        // Predicated region
        $region45: #{tpu_custom_call.1} parent=31 // pred_check
          %p287 = pneg %p286
        $region46: #{tpu_custom_call.1} parent=31 // pred_check_branch
          %289 = sbr.rel (%p287) target = $region48
        $region47: #{tpu_custom_call.1} parent=31 // pred_region
          %290 = vst [vmem:[#allocation2] sm:$0xff] 0.0
        $region48: #{tpu_custom_call.1} parent=31 // pred_fallthru
          _
        %v291 = vld [vmem:[%s242] sm:$0xff]
        %v292 = vld [vmem:[%s242 + $0x8] sm:$0xf]
        %v293 = vld [vmem:[%s242 + $0xc] sm:$0xff]
        %v294 = vld [vmem:[%s242 + $0x14] sm:$0xf]
        %v295 = vld [vmem:[%s242 + $0x18] sm:$0xff]
        %v296 = vld [vmem:[%s242 + $0x20] sm:$0xf]
        %v297 = vld [vmem:[%s242 + $0x24] sm:$0xff]
        %v298 = vld [vmem:[%s242 + $0x2c] sm:$0xf]
        %v299 = vld [vmem:[%s242 + $0x30] sm:$0xff]
        %v300 = vld [vmem:[%s242 + $0x38] sm:$0xf]
        %v301 = vld [vmem:[%s242 + $0x3c] sm:$0xff]
        %v302 = vld [vmem:[%s242 + $0x44] sm:$0xf]
        %v303 = vld [vmem:[%s242 + $0x48] sm:$0xff]
        %v304 = vld [vmem:[%s242 + $0x50] sm:$0xf]
        %v305 = vld [vmem:[%s242 + $0x54] sm:$0xff]
        %v306 = vld [vmem:[%s242 + $0x5c] sm:$0xf]
        %v307 = vld [vmem:[%s242 + $0x60] sm:$0xff]
        %v308 = vld [vmem:[%s242 + $0x68] sm:$0xf]
        %v309 = vld [vmem:[%s242 + $0x6c] sm:$0xff]
        %v310 = vld [vmem:[%s242 + $0x74] sm:$0xf]
        %v311 = vld [vmem:[%s242 + $0x78] sm:$0xff]
        %v312 = vld [vmem:[%s242 + $0x80] sm:$0xf]
        %v313 = vld [vmem:[%s242 + $0x84] sm:$0xff]
        %v314 = vld [vmem:[%s242 + $0x8c] sm:$0xf]
        %v315 = vld [vmem:[%s242 + $0x90] sm:$0xff]
        %v316 = vld [vmem:[%s242 + $0x98] sm:$0xf]
        %v317 = vld [vmem:[%s242 + $0x9c] sm:$0xff]
        %v318 = vld [vmem:[%s242 + $0xa4] sm:$0xf]
        %v319 = vld [vmem:[%s242 + $0xa8] sm:$0xff]
        %v320 = vld [vmem:[%s242 + $0xb0] sm:$0xf]
        %v321 = vld [vmem:[%s242 + $0xb4] sm:$0xff]
        %v322 = vld [vmem:[%s242 + $0xbc] sm:$0xf]
        %v323 = vld [vmem:[%s251] sm:$0x1]
        %v325 = vperm.slane %v323, 0
        %v327 = vld [vmem:[#allocation2] sm:$0xff]
        %v328 = vld [vmem:[%s232] sm:$0xff]
        %v329 = vld [vmem:[%s232 + $0x8] sm:$0xff]
        %v330 = vld [vmem:[%s232 + $0x10] sm:$0xff]
        %v331 = vpack.c.bf16 %v327, %v327
        %v364 = vunpack.c.l.b16 %v291
        %v365 = vunpack.c.h.b16 %v291
        %v366 = vunpack.c.l.b16 %v292
        %v367 = vunpack.c.l.b16 %v293
        %v368 = vunpack.c.h.b16 %v293
        %v369 = vunpack.c.l.b16 %v294
        %v370 = vunpack.c.l.b16 %v295
        %v371 = vunpack.c.h.b16 %v295
        %v372 = vunpack.c.l.b16 %v296
        %v373 = vunpack.c.l.b16 %v297
        %v374 = vunpack.c.h.b16 %v297
        %v375 = vunpack.c.l.b16 %v298
        %v376 = vunpack.c.l.b16 %v299
        %v377 = vunpack.c.h.b16 %v299
        %v378 = vunpack.c.l.b16 %v300
        %v379 = vunpack.c.l.b16 %v301
        %v380 = vunpack.c.h.b16 %v301
        %v381 = vunpack.c.l.b16 %v302
        %v382 = vunpack.c.l.b16 %v303
        %v383 = vunpack.c.h.b16 %v303
        %v384 = vunpack.c.l.b16 %v304
        %v385 = vunpack.c.l.b16 %v305
        %v386 = vunpack.c.h.b16 %v305
        %v387 = vunpack.c.l.b16 %v306
        %v388 = vunpack.c.l.b16 %v307
        %v389 = vunpack.c.h.b16 %v307
        %v390 = vunpack.c.l.b16 %v308
        %v391 = vunpack.c.l.b16 %v309
        %v392 = vunpack.c.h.b16 %v309
        %v393 = vunpack.c.l.b16 %v310
        %v394 = vunpack.c.l.b16 %v311
        %v395 = vunpack.c.h.b16 %v311
        %v396 = vunpack.c.l.b16 %v312
        %v397 = vunpack.c.l.b16 %v313
        %v398 = vunpack.c.h.b16 %v313
        %v399 = vunpack.c.l.b16 %v314
        %v400 = vunpack.c.l.b16 %v315
        %v401 = vunpack.c.h.b16 %v315
        %v402 = vunpack.c.l.b16 %v316
        %v403 = vunpack.c.l.b16 %v317
        %v404 = vunpack.c.h.b16 %v317
        %v405 = vunpack.c.l.b16 %v318
        %v406 = vunpack.c.l.b16 %v319
        %v407 = vunpack.c.h.b16 %v319
        %v408 = vunpack.c.l.b16 %v320
        %v409 = vunpack.c.l.b16 %v321
        %v410 = vunpack.c.h.b16 %v321
        %v411 = vunpack.c.l.b16 %v322
        %v412 = vpack.c.b16 %v367, %v364
        %v413 = vpack.c.b16 %v368, %v365
        %v414 = vpack.c.b16 %v369, %v366
        %v415 = vpack.c.b16 %v373, %v370
        %v416 = vpack.c.b16 %v374, %v371
        %v417 = vpack.c.b16 %v375, %v372
        %v418 = vpack.c.b16 %v379, %v376
        %v419 = vpack.c.b16 %v380, %v377
        %v420 = vpack.c.b16 %v381, %v378
        %v421 = vpack.c.b16 %v385, %v382
        %v422 = vpack.c.b16 %v386, %v383
        %v423 = vpack.c.b16 %v387, %v384
        %v424 = vpack.c.b16 %v391, %v388
        %v425 = vpack.c.b16 %v392, %v389
        %v426 = vpack.c.b16 %v393, %v390
        %v427 = vpack.c.b16 %v397, %v394
        %v428 = vpack.c.b16 %v398, %v395
        %v429 = vpack.c.b16 %v399, %v396
        %v430 = vpack.c.b16 %v403, %v400
        %v431 = vpack.c.b16 %v404, %v401
        %v432 = vpack.c.b16 %v405, %v402
        %v433 = vpack.c.b16 %v409, %v406
        %v434 = vpack.c.b16 %v410, %v407
        %v435 = vpack.c.b16 %v411, %v408
        %460 = vmatpush.bf16.msra.mxu0 %v433
        %461 = vmatpush.bf16.msra.mxu0 %v430
        %462 = vmatpush.bf16.msra.mxu0 %v427
        %463 = vmatpush.bf16.msra.mxu0 %v424
        %464 = vmatpush.bf16.msra.mxu0 %v421
        %465 = vmatpush.bf16.msra.mxu0 %v418
        %466 = vmatpush.bf16.msra.mxu0 %v415
        %467 = vmatpush.bf16.msra.mxu0 %v412
        %468 = vmatmul.bf16.gmra.mxu0 %v331
        %v469 = vpop.f32.mrf.mxu0
        %v470 = vadd.f32 0.0, %v469
        %v471 = vpop.f32.mrf.mxu0
        %472 = vdwg.mxu0
        %473 = vmatpush.bf16.msra.mxu0 %v434
        %474 = vmatpush.bf16.msra.mxu0 %v431
        %475 = vmatpush.bf16.msra.mxu0 %v428
        %476 = vmatpush.bf16.msra.mxu0 %v425
        %477 = vmatpush.bf16.msra.mxu0 %v422
        %478 = vmatpush.bf16.msra.mxu0 %v419
        %479 = vmatpush.bf16.msra.mxu0 %v416
        %480 = vmatpush.bf16.msra.mxu0 %v413
        %481 = vmatmul.bf16.gmra.mxu0 %v331
        %v482 = vpop.f32.mrf.mxu0
        %v483 = vadd.f32 0.0, %v482
        %v484 = vpop.f32.mrf.mxu0
        %485 = vdwg.mxu0
        %486 = vmatpush.bf16.msra.mxu0 %v435
        %487 = vmatpush.bf16.msra.mxu0 %v432
        %488 = vmatpush.bf16.msra.mxu0 %v429
        %489 = vmatpush.bf16.msra.mxu0 %v426
        %490 = vmatpush.bf16.msra.mxu0 %v423
        %491 = vmatpush.bf16.msra.mxu0 %v420
        %492 = vmatpush.bf16.msra.mxu0 %v417
        %493 = vmatpush.bf16.msra.mxu0 %v414
        %494 = vmatmul.bf16.gmra.mxu0 %v331
        %v495 = vpop.f32.mrf.mxu0
        %v496 = vadd.f32 0.0, %v495
        %v497 = vpop.f32.mrf.mxu0
        %498 = vdwg.mxu0
        %v499 = vadd.f32 %v328, %v470
        %v500 = vxor.u32 %v499, 2147483648
        %v501 = vmul.f32 %v500, 1.442695
        %v502 = vpow.pop %v501
        %v503 = vadd.f32 %v502, 1.0
        %v504 = vrcp.pop %v503
        %v505 = vmul.f32 %v503, %v504
        %v506 = vsub.f32 1.0, %v505
        %v507 = vmul.f32 %v504, %v506
        %v508 = vadd.f32 %v504, %v507
        %vm509 = vweird.f32 %v503
        %vm510 = vweird.f32 %v504
        %vm511 = vmor %vm509, %vm510
        %v512 = vsel %vm511, %v504, %v508
        %v513 = vand.u32 2147483647, %v503
        %vm514 = vcmp.eq.f32.partialorder %v513, 8.507059e+37
        %v515 = vand.u32 %v503, 2147483648
        %v516 = vor.u32 1.1754944e-38, %v515
        %v517 = vsel %vm514, %v516, %v512
        %v518 = vmul.f32 1.0, %v517
        %v519 = vadd.f32 %v329, %v483
        %v520 = vxor.u32 %v519, 2147483648
        %v521 = vmul.f32 %v520, 1.442695
        %v522 = vpow.pop %v521
        %v523 = vadd.f32 %v522, 1.0
        %v524 = vrcp.pop %v523
        %v525 = vmul.f32 %v523, %v524
        %v526 = vsub.f32 1.0, %v525
        %v527 = vmul.f32 %v524, %v526
        %v528 = vadd.f32 %v524, %v527
        %vm529 = vweird.f32 %v523
        %vm530 = vweird.f32 %v524
        %vm531 = vmor %vm529, %vm530
        %v532 = vsel %vm531, %v524, %v528
        %v533 = vand.u32 2147483647, %v523
        %vm534 = vcmp.eq.f32.partialorder %v533, 8.507059e+37
        %v535 = vand.u32 %v523, 2147483648
        %v536 = vor.u32 1.1754944e-38, %v535
        %v537 = vsel %vm534, %v536, %v532
        %v538 = vmul.f32 1.0, %v537
        %v539 = vadd.f32 %v496, %v325
        %v540 = vmul.f32 %v518, %v539
        %v541 = vadd.f32 %v330, %v540
        %v542 = vtanh.pop %v541
        %v543 = vsub.f32 %v327, %v542
        %v544 = vmul.f32 %v538, %v543
        %v545 = vadd.f32 %v542, %v544
        %546 = vst [vmem:[%s283] sm:$0xff] %v545
        %s547 = scalar_lea.vmem %s232, 24 [#allocation3]
        %v548 = vld [vmem:[%s547] sm:$0xff]
        %v549 = vld [vmem:[%s547 + $0x8] sm:$0xff]
        %v550 = vld [vmem:[%s547 + $0x10] sm:$0xff]
        %v551 = vpack.c.bf16 %v545, %v545
        %552 = vmatpush.bf16.msra.mxu0 %v433
        %553 = vmatpush.bf16.msra.mxu0 %v430
        %554 = vmatpush.bf16.msra.mxu0 %v427
        %555 = vmatpush.bf16.msra.mxu0 %v424
        %556 = vmatpush.bf16.msra.mxu0 %v421
        %557 = vmatpush.bf16.msra.mxu0 %v418
        %558 = vmatpush.bf16.msra.mxu0 %v415
        %559 = vmatpush.bf16.msra.mxu0 %v412
        %560 = vmatmul.bf16.gmra.mxu0 %v551
        %v561 = vpop.f32.mrf.mxu0
        %v562 = vadd.f32 0.0, %v561
        %v563 = vpop.f32.mrf.mxu0
        %564 = vdwg.mxu0
        %565 = vmatpush.bf16.msra.mxu0 %v434
        %566 = vmatpush.bf16.msra.mxu0 %v431
        %567 = vmatpush.bf16.msra.mxu0 %v428
        %568 = vmatpush.bf16.msra.mxu0 %v425
        %569 = vmatpush.bf16.msra.mxu0 %v422
        %570 = vmatpush.bf16.msra.mxu0 %v419
        %571 = vmatpush.bf16.msra.mxu0 %v416
        %572 = vmatpush.bf16.msra.mxu0 %v413
        %573 = vmatmul.bf16.gmra.mxu0 %v551
        %v574 = vpop.f32.mrf.mxu0
        %v575 = vadd.f32 0.0, %v574
        %v576 = vpop.f32.mrf.mxu0
        %577 = vdwg.mxu0
        %578 = vmatpush.bf16.msra.mxu0 %v435
        %579 = vmatpush.bf16.msra.mxu0 %v432
        %580 = vmatpush.bf16.msra.mxu0 %v429
        %581 = vmatpush.bf16.msra.mxu0 %v426
        %582 = vmatpush.bf16.msra.mxu0 %v423
        %583 = vmatpush.bf16.msra.mxu0 %v420
        %584 = vmatpush.bf16.msra.mxu0 %v417
        %585 = vmatpush.bf16.msra.mxu0 %v414
        %586 = vmatmul.bf16.gmra.mxu0 %v551
        %v587 = vpop.f32.mrf.mxu0
        %v588 = vadd.f32 0.0, %v587
        %v589 = vpop.f32.mrf.mxu0
        %590 = vdwg.mxu0
        %v591 = vadd.f32 %v548, %v562
        %v592 = vxor.u32 %v591, 2147483648
        %v593 = vmul.f32 %v592, 1.442695
        %v594 = vpow.pop %v593
        %v595 = vadd.f32 %v594, 1.0
        %v596 = vrcp.pop %v595
        %v597 = vmul.f32 %v595, %v596
        %v598 = vsub.f32 1.0, %v597
        %v599 = vmul.f32 %v596, %v598
        %v600 = vadd.f32 %v596, %v599
        %vm601 = vweird.f32 %v595
        %vm602 = vweird.f32 %v596
        %vm603 = vmor %vm601, %vm602
        %v604 = vsel %vm603, %v596, %v600
        %v605 = vand.u32 2147483647, %v595
        %vm606 = vcmp.eq.f32.partialorder %v605, 8.507059e+37
        %v607 = vand.u32 %v595, 2147483648
        %v608 = vor.u32 1.1754944e-38, %v607
        %v609 = vsel %vm606, %v608, %v604
        %v610 = vmul.f32 1.0, %v609
        %v611 = vadd.f32 %v549, %v575
        %v612 = vxor.u32 %v611, 2147483648
        %v613 = vmul.f32 %v612, 1.442695
        %v614 = vpow.pop %v613
        %v615 = vadd.f32 %v614, 1.0
        %v616 = vrcp.pop %v615
        %v617 = vmul.f32 %v615, %v616
        %v618 = vsub.f32 1.0, %v617
        %v619 = vmul.f32 %v616, %v618
        %v620 = vadd.f32 %v616, %v619
        %vm621 = vweird.f32 %v615
        %vm622 = vweird.f32 %v616
        %vm623 = vmor %vm621, %vm622
        %v624 = vsel %vm623, %v616, %v620
        %v625 = vand.u32 2147483647, %v615
        %vm626 = vcmp.eq.f32.partialorder %v625, 8.507059e+37
        %v627 = vand.u32 %v615, 2147483648
        %v628 = vor.u32 1.1754944e-38, %v627
        %v629 = vsel %vm626, %v628, %v624
        %v630 = vmul.f32 1.0, %v629
        %v631 = vadd.f32 %v588, %v325
        %v632 = vmul.f32 %v610, %v631
        %v633 = vadd.f32 %v550, %v632
        %v634 = vtanh.pop %v633
        %v635 = vsub.f32 %v545, %v634
        %v636 = vmul.f32 %v630, %v635
        %v637 = vadd.f32 %v634, %v636
        %s638 = scalar_lea.vmem %s283, 8 [#allocation9]
        %639 = vst [vmem:[%s638] sm:$0xff] %v637
        %s640 = scalar_lea.vmem %s232, 48 [#allocation3]
        %v641 = vld [vmem:[%s640] sm:$0xff]
        %v642 = vld [vmem:[%s640 + $0x8] sm:$0xff]
        %v643 = vld [vmem:[%s640 + $0x10] sm:$0xff]
        %v644 = vpack.c.bf16 %v637, %v637
        %645 = vmatpush.bf16.msra.mxu0 %v433
        %646 = vmatpush.bf16.msra.mxu0 %v430
        %647 = vmatpush.bf16.msra.mxu0 %v427
        %648 = vmatpush.bf16.msra.mxu0 %v424
        %649 = vmatpush.bf16.msra.mxu0 %v421
        %650 = vmatpush.bf16.msra.mxu0 %v418
        %651 = vmatpush.bf16.msra.mxu0 %v415
        %652 = vmatpush.bf16.msra.mxu0 %v412
        %653 = vmatmul.bf16.gmra.mxu0 %v644
        %v654 = vpop.f32.mrf.mxu0
        %v655 = vadd.f32 0.0, %v654
        %v656 = vpop.f32.mrf.mxu0
        %657 = vdwg.mxu0
        %658 = vmatpush.bf16.msra.mxu0 %v434
        %659 = vmatpush.bf16.msra.mxu0 %v431
        %660 = vmatpush.bf16.msra.mxu0 %v428
        %661 = vmatpush.bf16.msra.mxu0 %v425
        %662 = vmatpush.bf16.msra.mxu0 %v422
        %663 = vmatpush.bf16.msra.mxu0 %v419
        %664 = vmatpush.bf16.msra.mxu0 %v416
        %665 = vmatpush.bf16.msra.mxu0 %v413
        %666 = vmatmul.bf16.gmra.mxu0 %v644
        %v667 = vpop.f32.mrf.mxu0
        %v668 = vadd.f32 0.0, %v667
        %v669 = vpop.f32.mrf.mxu0
        %670 = vdwg.mxu0
        %671 = vmatpush.bf16.msra.mxu0 %v435
        %672 = vmatpush.bf16.msra.mxu0 %v432
        %673 = vmatpush.bf16.msra.mxu0 %v429
        %674 = vmatpush.bf16.msra.mxu0 %v426
        %675 = vmatpush.bf16.msra.mxu0 %v423
        %676 = vmatpush.bf16.msra.mxu0 %v420
        %677 = vmatpush.bf16.msra.mxu0 %v417
        %678 = vmatpush.bf16.msra.mxu0 %v414
        %679 = vmatmul.bf16.gmra.mxu0 %v644
        %v680 = vpop.f32.mrf.mxu0
        %v681 = vadd.f32 0.0, %v680
        %v682 = vpop.f32.mrf.mxu0
        %683 = vdwg.mxu0
        %v684 = vadd.f32 %v641, %v655
        %v685 = vxor.u32 %v684, 2147483648
        %v686 = vmul.f32 %v685, 1.442695
        %v687 = vpow.pop %v686
        %v688 = vadd.f32 %v687, 1.0
        %v689 = vrcp.pop %v688
        %v690 = vmul.f32 %v688, %v689
        %v691 = vsub.f32 1.0, %v690
        %v692 = vmul.f32 %v689, %v691
        %v693 = vadd.f32 %v689, %v692
        %vm694 = vweird.f32 %v688
        %vm695 = vweird.f32 %v689
        %vm696 = vmor %vm694, %vm695
        %v697 = vsel %vm696, %v689, %v693
        %v698 = vand.u32 2147483647, %v688
        %vm699 = vcmp.eq.f32.partialorder %v698, 8.507059e+37
        %v700 = vand.u32 %v688, 2147483648
        %v701 = vor.u32 1.1754944e-38, %v700
        %v702 = vsel %vm699, %v701, %v697
        %v703 = vmul.f32 1.0, %v702
        %v704 = vadd.f32 %v642, %v668
        %v705 = vxor.u32 %v704, 2147483648
        %v706 = vmul.f32 %v705, 1.442695
        %v707 = vpow.pop %v706
        %v708 = vadd.f32 %v707, 1.0
        %v709 = vrcp.pop %v708
        %v710 = vmul.f32 %v708, %v709
        %v711 = vsub.f32 1.0, %v710
        %v712 = vmul.f32 %v709, %v711
        %v713 = vadd.f32 %v709, %v712
        %vm714 = vweird.f32 %v708
        %vm715 = vweird.f32 %v709
        %vm716 = vmor %vm714, %vm715
        %v717 = vsel %vm716, %v709, %v713
        %v718 = vand.u32 2147483647, %v708
        %vm719 = vcmp.eq.f32.partialorder %v718, 8.507059e+37
        %v720 = vand.u32 %v708, 2147483648
        %v721 = vor.u32 1.1754944e-38, %v720
        %v722 = vsel %vm719, %v721, %v717
        %v723 = vmul.f32 1.0, %v722
        %v724 = vadd.f32 %v681, %v325
        %v725 = vmul.f32 %v703, %v724
        %v726 = vadd.f32 %v643, %v725
        %v727 = vtanh.pop %v726
        %v728 = vsub.f32 %v637, %v727
        %v729 = vmul.f32 %v723, %v728
        %v730 = vadd.f32 %v727, %v729
        %s731 = scalar_lea.vmem %s283, 16 [#allocation9]
        %732 = vst [vmem:[%s731] sm:$0xff] %v730
        %s733 = scalar_lea.vmem %s232, 72 [#allocation3]
        %v734 = vld [vmem:[%s733] sm:$0xff]
        %v735 = vld [vmem:[%s733 + $0x8] sm:$0xff]
        %v736 = vld [vmem:[%s733 + $0x10] sm:$0xff]
        %v737 = vpack.c.bf16 %v730, %v730
        %738 = vmatpush.bf16.msra.mxu0 %v433
        %739 = vmatpush.bf16.msra.mxu0 %v430
        %740 = vmatpush.bf16.msra.mxu0 %v427
        %741 = vmatpush.bf16.msra.mxu0 %v424
        %742 = vmatpush.bf16.msra.mxu0 %v421
        %743 = vmatpush.bf16.msra.mxu0 %v418
        %744 = vmatpush.bf16.msra.mxu0 %v415
        %745 = vmatpush.bf16.msra.mxu0 %v412
        %746 = vmatmul.bf16.gmra.mxu0 %v737
        %v747 = vpop.f32.mrf.mxu0
        %v748 = vadd.f32 0.0, %v747
        %v749 = vpop.f32.mrf.mxu0
        %750 = vdwg.mxu0
        %751 = vmatpush.bf16.msra.mxu0 %v434
        %752 = vmatpush.bf16.msra.mxu0 %v431
        %753 = vmatpush.bf16.msra.mxu0 %v428
        %754 = vmatpush.bf16.msra.mxu0 %v425
        %755 = vmatpush.bf16.msra.mxu0 %v422
        %756 = vmatpush.bf16.msra.mxu0 %v419
        %757 = vmatpush.bf16.msra.mxu0 %v416
        %758 = vmatpush.bf16.msra.mxu0 %v413
        %759 = vmatmul.bf16.gmra.mxu0 %v737
        %v760 = vpop.f32.mrf.mxu0
        %v761 = vadd.f32 0.0, %v760
        %v762 = vpop.f32.mrf.mxu0
        %763 = vdwg.mxu0
        %764 = vmatpush.bf16.msra.mxu0 %v435
        %765 = vmatpush.bf16.msra.mxu0 %v432
        %766 = vmatpush.bf16.msra.mxu0 %v429
        %767 = vmatpush.bf16.msra.mxu0 %v426
        %768 = vmatpush.bf16.msra.mxu0 %v423
        %769 = vmatpush.bf16.msra.mxu0 %v420
        %770 = vmatpush.bf16.msra.mxu0 %v417
        %771 = vmatpush.bf16.msra.mxu0 %v414
        %772 = vmatmul.bf16.gmra.mxu0 %v737
        %v773 = vpop.f32.mrf.mxu0
        %v774 = vadd.f32 0.0, %v773
        %v775 = vpop.f32.mrf.mxu0
        %776 = vdwg.mxu0
        %v777 = vadd.f32 %v734, %v748
        %v778 = vxor.u32 %v777, 2147483648
        %v779 = vmul.f32 %v778, 1.442695
        %v780 = vpow.pop %v779
        %v781 = vadd.f32 %v780, 1.0
        %v782 = vrcp.pop %v781
        %v783 = vmul.f32 %v781, %v782
        %v784 = vsub.f32 1.0, %v783
        %v785 = vmul.f32 %v782, %v784
        %v786 = vadd.f32 %v782, %v785
        %vm787 = vweird.f32 %v781
        %vm788 = vweird.f32 %v782
        %vm789 = vmor %vm787, %vm788
        %v790 = vsel %vm789, %v782, %v786
        %v791 = vand.u32 2147483647, %v781
        %vm792 = vcmp.eq.f32.partialorder %v791, 8.507059e+37
        %v793 = vand.u32 %v781, 2147483648
        %v794 = vor.u32 1.1754944e-38, %v793
        %v795 = vsel %vm792, %v794, %v790
        %v796 = vmul.f32 1.0, %v795
        %v797 = vadd.f32 %v735, %v761
        %v798 = vxor.u32 %v797, 2147483648
        %v799 = vmul.f32 %v798, 1.442695
        %v800 = vpow.pop %v799
        %v801 = vadd.f32 %v800, 1.0
        %v802 = vrcp.pop %v801
        %v803 = vmul.f32 %v801, %v802
        %v804 = vsub.f32 1.0, %v803
        %v805 = vmul.f32 %v802, %v804
        %v806 = vadd.f32 %v802, %v805
        %vm807 = vweird.f32 %v801
        %vm808 = vweird.f32 %v802
        %vm809 = vmor %vm807, %vm808
        %v810 = vsel %vm809, %v802, %v806
        %v811 = vand.u32 2147483647, %v801
        %vm812 = vcmp.eq.f32.partialorder %v811, 8.507059e+37
        %v813 = vand.u32 %v801, 2147483648
        %v814 = vor.u32 1.1754944e-38, %v813
        %v815 = vsel %vm812, %v814, %v810
        %v816 = vmul.f32 1.0, %v815
        %v817 = vadd.f32 %v774, %v325
        %v818 = vmul.f32 %v796, %v817
        %v819 = vadd.f32 %v736, %v818
        %v820 = vtanh.pop %v819
        %v821 = vsub.f32 %v730, %v820
        %v822 = vmul.f32 %v816, %v821
        %v823 = vadd.f32 %v820, %v822
        %s824 = scalar_lea.vmem %s283, 24 [#allocation9]
        %825 = vst [vmem:[%s824] sm:$0xff] %v823
        %s826 = scalar_lea.vmem %s232, 96 [#allocation3]
        %v827 = vld [vmem:[%s826] sm:$0xff]
        %v828 = vld [vmem:[%s826 + $0x8] sm:$0xff]
        %v829 = vld [vmem:[%s826 + $0x10] sm:$0xff]
        %v830 = vpack.c.bf16 %v823, %v823
        %831 = vmatpush.bf16.msra.mxu0 %v433
        %832 = vmatpush.bf16.msra.mxu0 %v430
        %833 = vmatpush.bf16.msra.mxu0 %v427
        %834 = vmatpush.bf16.msra.mxu0 %v424
        %835 = vmatpush.bf16.msra.mxu0 %v421
        %836 = vmatpush.bf16.msra.mxu0 %v418
        %837 = vmatpush.bf16.msra.mxu0 %v415
        %838 = vmatpush.bf16.msra.mxu0 %v412
        %839 = vmatmul.bf16.gmra.mxu0 %v830
        %v840 = vpop.f32.mrf.mxu0
        %v841 = vadd.f32 0.0, %v840
        %v842 = vpop.f32.mrf.mxu0
        %843 = vdwg.mxu0
        %844 = vmatpush.bf16.msra.mxu0 %v434
        %845 = vmatpush.bf16.msra.mxu0 %v431
        %846 = vmatpush.bf16.msra.mxu0 %v428
        %847 = vmatpush.bf16.msra.mxu0 %v425
        %848 = vmatpush.bf16.msra.mxu0 %v422
        %849 = vmatpush.bf16.msra.mxu0 %v419
        %850 = vmatpush.bf16.msra.mxu0 %v416
        %851 = vmatpush.bf16.msra.mxu0 %v413
        %852 = vmatmul.bf16.gmra.mxu0 %v830
        %v853 = vpop.f32.mrf.mxu0
        %v854 = vadd.f32 0.0, %v853
        %v855 = vpop.f32.mrf.mxu0
        %856 = vdwg.mxu0
        %857 = vmatpush.bf16.msra.mxu0 %v435
        %858 = vmatpush.bf16.msra.mxu0 %v432
        %859 = vmatpush.bf16.msra.mxu0 %v429
        %860 = vmatpush.bf16.msra.mxu0 %v426
        %861 = vmatpush.bf16.msra.mxu0 %v423
        %862 = vmatpush.bf16.msra.mxu0 %v420
        %863 = vmatpush.bf16.msra.mxu0 %v417
        %864 = vmatpush.bf16.msra.mxu0 %v414
        %865 = vmatmul.bf16.gmra.mxu0 %v830
        %v866 = vpop.f32.mrf.mxu0
        %v867 = vadd.f32 0.0, %v866
        %v868 = vpop.f32.mrf.mxu0
        %869 = vdwg.mxu0
        %v870 = vadd.f32 %v827, %v841
        %v871 = vxor.u32 %v870, 2147483648
        %v872 = vmul.f32 %v871, 1.442695
        %v873 = vpow.pop %v872
        %v874 = vadd.f32 %v873, 1.0
        %v875 = vrcp.pop %v874
        %v876 = vmul.f32 %v874, %v875
        %v877 = vsub.f32 1.0, %v876
        %v878 = vmul.f32 %v875, %v877
        %v879 = vadd.f32 %v875, %v878
        %vm880 = vweird.f32 %v874
        %vm881 = vweird.f32 %v875
        %vm882 = vmor %vm880, %vm881
        %v883 = vsel %vm882, %v875, %v879
        %v884 = vand.u32 2147483647, %v874
        %vm885 = vcmp.eq.f32.partialorder %v884, 8.507059e+37
        %v886 = vand.u32 %v874, 2147483648
        %v887 = vor.u32 1.1754944e-38, %v886
        %v888 = vsel %vm885, %v887, %v883
        %v889 = vmul.f32 1.0, %v888
        %v890 = vadd.f32 %v828, %v854
        %v891 = vxor.u32 %v890, 2147483648
        %v892 = vmul.f32 %v891, 1.442695
        %v893 = vpow.pop %v892
        %v894 = vadd.f32 %v893, 1.0
        %v895 = vrcp.pop %v894
        %v896 = vmul.f32 %v894, %v895
        %v897 = vsub.f32 1.0, %v896
        %v898 = vmul.f32 %v895, %v897
        %v899 = vadd.f32 %v895, %v898
        %vm900 = vweird.f32 %v894
        %vm901 = vweird.f32 %v895
        %vm902 = vmor %vm900, %vm901
        %v903 = vsel %vm902, %v895, %v899
        %v904 = vand.u32 2147483647, %v894
        %vm905 = vcmp.eq.f32.partialorder %v904, 8.507059e+37
        %v906 = vand.u32 %v894, 2147483648
        %v907 = vor.u32 1.1754944e-38, %v906
        %v908 = vsel %vm905, %v907, %v903
        %v909 = vmul.f32 1.0, %v908
        %v910 = vadd.f32 %v867, %v325
        %v911 = vmul.f32 %v889, %v910
        %v912 = vadd.f32 %v829, %v911
        %v913 = vtanh.pop %v912
        %v914 = vsub.f32 %v823, %v913
        %v915 = vmul.f32 %v909, %v914
        %v916 = vadd.f32 %v913, %v915
        %s917 = scalar_lea.vmem %s283, 32 [#allocation9]
        %918 = vst [vmem:[%s917] sm:$0xff] %v916
        %s919 = scalar_lea.vmem %s232, 120 [#allocation3]
        %v920 = vld [vmem:[%s919] sm:$0xff]
        %v921 = vld [vmem:[%s919 + $0x8] sm:$0xff]
        %v922 = vld [vmem:[%s919 + $0x10] sm:$0xff]
        %v923 = vpack.c.bf16 %v916, %v916
        %924 = vmatpush.bf16.msra.mxu0 %v433
        %925 = vmatpush.bf16.msra.mxu0 %v430
        %926 = vmatpush.bf16.msra.mxu0 %v427
        %927 = vmatpush.bf16.msra.mxu0 %v424
        %928 = vmatpush.bf16.msra.mxu0 %v421
        %929 = vmatpush.bf16.msra.mxu0 %v418
        %930 = vmatpush.bf16.msra.mxu0 %v415
        %931 = vmatpush.bf16.msra.mxu0 %v412
        %932 = vmatmul.bf16.gmra.mxu0 %v923
        %v933 = vpop.f32.mrf.mxu0
        %v934 = vadd.f32 0.0, %v933
        %v935 = vpop.f32.mrf.mxu0
        %936 = vdwg.mxu0
        %937 = vmatpush.bf16.msra.mxu0 %v434
        %938 = vmatpush.bf16.msra.mxu0 %v431
        %939 = vmatpush.bf16.msra.mxu0 %v428
        %940 = vmatpush.bf16.msra.mxu0 %v425
        %941 = vmatpush.bf16.msra.mxu0 %v422
        %942 = vmatpush.bf16.msra.mxu0 %v419
        %943 = vmatpush.bf16.msra.mxu0 %v416
        %944 = vmatpush.bf16.msra.mxu0 %v413
        %945 = vmatmul.bf16.gmra.mxu0 %v923
        %v946 = vpop.f32.mrf.mxu0
        %v947 = vadd.f32 0.0, %v946
        %v948 = vpop.f32.mrf.mxu0
        %949 = vdwg.mxu0
        %950 = vmatpush.bf16.msra.mxu0 %v435
        %951 = vmatpush.bf16.msra.mxu0 %v432
        %952 = vmatpush.bf16.msra.mxu0 %v429
        %953 = vmatpush.bf16.msra.mxu0 %v426
        %954 = vmatpush.bf16.msra.mxu0 %v423
        %955 = vmatpush.bf16.msra.mxu0 %v420
        %956 = vmatpush.bf16.msra.mxu0 %v417
        %957 = vmatpush.bf16.msra.mxu0 %v414
        %958 = vmatmul.bf16.gmra.mxu0 %v923
        %v959 = vpop.f32.mrf.mxu0
        %v960 = vadd.f32 0.0, %v959
        %v961 = vpop.f32.mrf.mxu0
        %962 = vdwg.mxu0
        %v963 = vadd.f32 %v920, %v934
        %v964 = vxor.u32 %v963, 2147483648
        %v965 = vmul.f32 %v964, 1.442695
        %v966 = vpow.pop %v965
        %v967 = vadd.f32 %v966, 1.0
        %v968 = vrcp.pop %v967
        %v969 = vmul.f32 %v967, %v968
        %v970 = vsub.f32 1.0, %v969
        %v971 = vmul.f32 %v968, %v970
        %v972 = vadd.f32 %v968, %v971
        %vm973 = vweird.f32 %v967
        %vm974 = vweird.f32 %v968
        %vm975 = vmor %vm973, %vm974
        %v976 = vsel %vm975, %v968, %v972
        %v977 = vand.u32 2147483647, %v967
        %vm978 = vcmp.eq.f32.partialorder %v977, 8.507059e+37
        %v979 = vand.u32 %v967, 2147483648
        %v980 = vor.u32 1.1754944e-38, %v979
        %v981 = vsel %vm978, %v980, %v976
        %v982 = vmul.f32 1.0, %v981
        %v983 = vadd.f32 %v921, %v947
        %v984 = vxor.u32 %v983, 2147483648
        %v985 = vmul.f32 %v984, 1.442695
        %v986 = vpow.pop %v985
        %v987 = vadd.f32 %v986, 1.0
        %v988 = vrcp.pop %v987
        %v989 = vmul.f32 %v987, %v988
        %v990 = vsub.f32 1.0, %v989
        %v991 = vmul.f32 %v988, %v990
        %v992 = vadd.f32 %v988, %v991
        %vm993 = vweird.f32 %v987
        %vm994 = vweird.f32 %v988
        %vm995 = vmor %vm993, %vm994
        %v996 = vsel %vm995, %v988, %v992
        %v997 = vand.u32 2147483647, %v987
        %vm998 = vcmp.eq.f32.partialorder %v997, 8.507059e+37
        %v999 = vand.u32 %v987, 2147483648
        %v1000 = vor.u32 1.1754944e-38, %v999
        %v1001 = vsel %vm998, %v1000, %v996
        %v1002 = vmul.f32 1.0, %v1001
        %v1003 = vadd.f32 %v960, %v325
        %v1004 = vmul.f32 %v982, %v1003
        %v1005 = vadd.f32 %v922, %v1004
        %v1006 = vtanh.pop %v1005
        %v1007 = vsub.f32 %v916, %v1006
        %v1008 = vmul.f32 %v1002, %v1007
        %v1009 = vadd.f32 %v1006, %v1008
        %s1010 = scalar_lea.vmem %s283, 40 [#allocation9]
        %1011 = vst [vmem:[%s1010] sm:$0xff] %v1009
        %s1012 = scalar_lea.vmem %s232, 144 [#allocation3]
        %v1013 = vld [vmem:[%s1012] sm:$0xff]
        %v1014 = vld [vmem:[%s1012 + $0x8] sm:$0xff]
        %v1015 = vld [vmem:[%s1012 + $0x10] sm:$0xff]
        %v1016 = vpack.c.bf16 %v1009, %v1009
        %1017 = vmatpush.bf16.msra.mxu0 %v433
        %1018 = vmatpush.bf16.msra.mxu0 %v430
        %1019 = vmatpush.bf16.msra.mxu0 %v427
        %1020 = vmatpush.bf16.msra.mxu0 %v424
        %1021 = vmatpush.bf16.msra.mxu0 %v421
        %1022 = vmatpush.bf16.msra.mxu0 %v418
        %1023 = vmatpush.bf16.msra.mxu0 %v415
        %1024 = vmatpush.bf16.msra.mxu0 %v412
        %1025 = vmatmul.bf16.gmra.mxu0 %v1016
        %v1026 = vpop.f32.mrf.mxu0
        %v1027 = vadd.f32 0.0, %v1026
        %v1028 = vpop.f32.mrf.mxu0
        %1029 = vdwg.mxu0
        %1030 = vmatpush.bf16.msra.mxu0 %v434
        %1031 = vmatpush.bf16.msra.mxu0 %v431
        %1032 = vmatpush.bf16.msra.mxu0 %v428
        %1033 = vmatpush.bf16.msra.mxu0 %v425
        %1034 = vmatpush.bf16.msra.mxu0 %v422
        %1035 = vmatpush.bf16.msra.mxu0 %v419
        %1036 = vmatpush.bf16.msra.mxu0 %v416
        %1037 = vmatpush.bf16.msra.mxu0 %v413
        %1038 = vmatmul.bf16.gmra.mxu0 %v1016
        %v1039 = vpop.f32.mrf.mxu0
        %v1040 = vadd.f32 0.0, %v1039
        %v1041 = vpop.f32.mrf.mxu0
        %1042 = vdwg.mxu0
        %1043 = vmatpush.bf16.msra.mxu0 %v435
        %1044 = vmatpush.bf16.msra.mxu0 %v432
        %1045 = vmatpush.bf16.msra.mxu0 %v429
        %1046 = vmatpush.bf16.msra.mxu0 %v426
        %1047 = vmatpush.bf16.msra.mxu0 %v423
        %1048 = vmatpush.bf16.msra.mxu0 %v420
        %1049 = vmatpush.bf16.msra.mxu0 %v417
        %1050 = vmatpush.bf16.msra.mxu0 %v414
        %1051 = vmatmul.bf16.gmra.mxu0 %v1016
        %v1052 = vpop.f32.mrf.mxu0
        %v1053 = vadd.f32 0.0, %v1052
        %v1054 = vpop.f32.mrf.mxu0
        %1055 = vdwg.mxu0
        %v1056 = vadd.f32 %v1013, %v1027
        %v1057 = vxor.u32 %v1056, 2147483648
        %v1058 = vmul.f32 %v1057, 1.442695
        %v1059 = vpow.pop %v1058
        %v1060 = vadd.f32 %v1059, 1.0
        %v1061 = vrcp.pop %v1060
        %v1062 = vmul.f32 %v1060, %v1061
        %v1063 = vsub.f32 1.0, %v1062
        %v1064 = vmul.f32 %v1061, %v1063
        %v1065 = vadd.f32 %v1061, %v1064
        %vm1066 = vweird.f32 %v1060
        %vm1067 = vweird.f32 %v1061
        %vm1068 = vmor %vm1066, %vm1067
        %v1069 = vsel %vm1068, %v1061, %v1065
        %v1070 = vand.u32 2147483647, %v1060
        %vm1071 = vcmp.eq.f32.partialorder %v1070, 8.507059e+37
        %v1072 = vand.u32 %v1060, 2147483648
        %v1073 = vor.u32 1.1754944e-38, %v1072
        %v1074 = vsel %vm1071, %v1073, %v1069
        %v1075 = vmul.f32 1.0, %v1074
        %v1076 = vadd.f32 %v1014, %v1040
        %v1077 = vxor.u32 %v1076, 2147483648
        %v1078 = vmul.f32 %v1077, 1.442695
        %v1079 = vpow.pop %v1078
        %v1080 = vadd.f32 %v1079, 1.0
        %v1081 = vrcp.pop %v1080
        %v1082 = vmul.f32 %v1080, %v1081
        %v1083 = vsub.f32 1.0, %v1082
        %v1084 = vmul.f32 %v1081, %v1083
        %v1085 = vadd.f32 %v1081, %v1084
        %vm1086 = vweird.f32 %v1080
        %vm1087 = vweird.f32 %v1081
        %vm1088 = vmor %vm1086, %vm1087
        %v1089 = vsel %vm1088, %v1081, %v1085
        %v1090 = vand.u32 2147483647, %v1080
        %vm1091 = vcmp.eq.f32.partialorder %v1090, 8.507059e+37
        %v1092 = vand.u32 %v1080, 2147483648
        %v1093 = vor.u32 1.1754944e-38, %v1092
        %v1094 = vsel %vm1091, %v1093, %v1089
        %v1095 = vmul.f32 1.0, %v1094
        %v1096 = vadd.f32 %v1053, %v325
        %v1097 = vmul.f32 %v1075, %v1096
        %v1098 = vadd.f32 %v1015, %v1097
        %v1099 = vtanh.pop %v1098
        %v1100 = vsub.f32 %v1009, %v1099
        %v1101 = vmul.f32 %v1095, %v1100
        %v1102 = vadd.f32 %v1099, %v1101
        %s1103 = scalar_lea.vmem %s283, 48 [#allocation9]
        %1104 = vst [vmem:[%s1103] sm:$0xff] %v1102
        %s1105 = scalar_lea.vmem %s232, 168 [#allocation3]
        %v1106 = vld [vmem:[%s1105] sm:$0xff]
        %v1107 = vld [vmem:[%s1105 + $0x8] sm:$0xff]
        %v1108 = vld [vmem:[%s1105 + $0x10] sm:$0xff]
        %v1109 = vpack.c.bf16 %v1102, %v1102
        %1110 = vmatpush.bf16.msra.mxu0 %v433
        %1111 = vmatpush.bf16.msra.mxu0 %v430
        %1112 = vmatpush.bf16.msra.mxu0 %v427
        %1113 = vmatpush.bf16.msra.mxu0 %v424
        %1114 = vmatpush.bf16.msra.mxu0 %v421
        %1115 = vmatpush.bf16.msra.mxu0 %v418
        %1116 = vmatpush.bf16.msra.mxu0 %v415
        %1117 = vmatpush.bf16.msra.mxu0 %v412
        %1118 = vmatmul.bf16.gmra.mxu0 %v1109
        %v1119 = vpop.f32.mrf.mxu0
        %v1120 = vadd.f32 0.0, %v1119
        %v1121 = vpop.f32.mrf.mxu0
        %1122 = vdwg.mxu0
        %1123 = vmatpush.bf16.msra.mxu0 %v434
        %1124 = vmatpush.bf16.msra.mxu0 %v431
        %1125 = vmatpush.bf16.msra.mxu0 %v428
        %1126 = vmatpush.bf16.msra.mxu0 %v425
        %1127 = vmatpush.bf16.msra.mxu0 %v422
        %1128 = vmatpush.bf16.msra.mxu0 %v419
        %1129 = vmatpush.bf16.msra.mxu0 %v416
        %1130 = vmatpush.bf16.msra.mxu0 %v413
        %1131 = vmatmul.bf16.gmra.mxu0 %v1109
        %v1132 = vpop.f32.mrf.mxu0
        %v1133 = vadd.f32 0.0, %v1132
        %v1134 = vpop.f32.mrf.mxu0
        %1135 = vdwg.mxu0
        %1136 = vmatpush.bf16.msra.mxu0 %v435
        %1137 = vmatpush.bf16.msra.mxu0 %v432
        %1138 = vmatpush.bf16.msra.mxu0 %v429
        %1139 = vmatpush.bf16.msra.mxu0 %v426
        %1140 = vmatpush.bf16.msra.mxu0 %v423
        %1141 = vmatpush.bf16.msra.mxu0 %v420
        %1142 = vmatpush.bf16.msra.mxu0 %v417
        %1143 = vmatpush.bf16.msra.mxu0 %v414
        %1144 = vmatmul.bf16.gmra.mxu0 %v1109
        %v1145 = vpop.f32.mrf.mxu0
        %v1146 = vadd.f32 0.0, %v1145
        %v1147 = vpop.f32.mrf.mxu0
        %1148 = vdwg.mxu0
        %v1149 = vadd.f32 %v1106, %v1120
        %v1150 = vxor.u32 %v1149, 2147483648
        %v1151 = vmul.f32 %v1150, 1.442695
        %v1152 = vpow.pop %v1151
        %v1153 = vadd.f32 %v1152, 1.0
        %v1154 = vrcp.pop %v1153
        %v1155 = vmul.f32 %v1153, %v1154
        %v1156 = vsub.f32 1.0, %v1155
        %v1157 = vmul.f32 %v1154, %v1156
        %v1158 = vadd.f32 %v1154, %v1157
        %vm1159 = vweird.f32 %v1153
        %vm1160 = vweird.f32 %v1154
        %vm1161 = vmor %vm1159, %vm1160
        %v1162 = vsel %vm1161, %v1154, %v1158
        %v1163 = vand.u32 2147483647, %v1153
        %vm1164 = vcmp.eq.f32.partialorder %v1163, 8.507059e+37
        %v1165 = vand.u32 %v1153, 2147483648
        %v1166 = vor.u32 1.1754944e-38, %v1165
        %v1167 = vsel %vm1164, %v1166, %v1162
        %v1168 = vmul.f32 1.0, %v1167
        %v1169 = vadd.f32 %v1107, %v1133
        %v1170 = vxor.u32 %v1169, 2147483648
        %v1171 = vmul.f32 %v1170, 1.442695
        %v1172 = vpow.pop %v1171
        %v1173 = vadd.f32 %v1172, 1.0
        %v1174 = vrcp.pop %v1173
        %v1175 = vmul.f32 %v1173, %v1174
        %v1176 = vsub.f32 1.0, %v1175
        %v1177 = vmul.f32 %v1174, %v1176
        %v1178 = vadd.f32 %v1174, %v1177
        %vm1179 = vweird.f32 %v1173
        %vm1180 = vweird.f32 %v1174
        %vm1181 = vmor %vm1179, %vm1180
        %v1182 = vsel %vm1181, %v1174, %v1178
        %v1183 = vand.u32 2147483647, %v1173
        %vm1184 = vcmp.eq.f32.partialorder %v1183, 8.507059e+37
        %v1185 = vand.u32 %v1173, 2147483648
        %v1186 = vor.u32 1.1754944e-38, %v1185
        %v1187 = vsel %vm1184, %v1186, %v1182
        %v1188 = vmul.f32 1.0, %v1187
        %v1189 = vadd.f32 %v1146, %v325
        %v1190 = vmul.f32 %v1168, %v1189
        %v1191 = vadd.f32 %v1108, %v1190
        %v1192 = vtanh.pop %v1191
        %v1193 = vsub.f32 %v1102, %v1192
        %v1194 = vmul.f32 %v1188, %v1193
        %v1195 = vadd.f32 %v1192, %v1194
        %s1196 = scalar_lea.vmem %s283, 56 [#allocation9]
        %1197 = vst [vmem:[%s1196] sm:$0xff] %v1195
        %1198 = vst [vmem:[#allocation2] sm:$0xff] %v1195
        %s1199 = sand.u32 %s125, 1
        %s1200 = scalar_lea.sflag [#allocation5], %s1199
        %s1201 = sand.u32 %s125, 1
        %s1202 = smul.addr %s1201, 64
        %s1203 = scalar_lea.vmem [#allocation9], %s1202
        // Predicated region
        $region49: #{tpu_custom_call.1} parent=31 // pred_check
          %p1204 = pneg %p135
        $region50: #{tpu_custom_call.1} parent=31 // pred_check_branch
          %1206 = sbr.rel (%p1204) target = $region52
        $region51: #{tpu_custom_call.1} parent=31 // pred_region
          %s1207 = smul.u32 8, %s28
          %1209 = vsyncadd %s1200, 0
          %s1210 = smul.addr %s27, 8
          %s1211 = sadd.s32 %s1207, %s1210
          %s1212 = smul.addr %s1211, 8
          %s1213 = scalar_lea.hbm %s3, %s1212
          %s1214 = sshll.u32 %s1203, 4
          %s1215 = int_to_ptr.vmem [resolvable:$true] %s1214
          %s1216 = sshll.u32 %s1213, 4
          %s1217 = int_to_ptr.hbm [resolvable:$true] %s1216
          %1222 = dma.vmem_to_hbm [thread:$0]  %s1215, 1024, %s1217, %s1200, 128, 128, 8
        $region52: #{tpu_custom_call.1} parent=31 // pred_fallthru
          _
      $region32: #{tpu_custom_call.1} parent=5 // pred_fallthru
        _
      %p1223 = scmp.le.s32.totalorder 2, %s18
      // Predicated region
      $region53: #{tpu_custom_call.1} parent=5 // pred_check
        %p1224 = pneg %p1223
      $region54: #{tpu_custom_call.1} parent=5 // pred_check_branch
        %1226 = sbr.rel (%p1224) target = $region56
      $region55: #{tpu_custom_call.1} parent=5 // pred_region
        %s1227 = ssub.s32 %s18, 2
        // Predicated region
        $region57: #{tpu_custom_call.1} parent=55 // pred_check
          %p1228 = pneg %p141
        $region58: #{tpu_custom_call.1} parent=55 // pred_check_branch
          %1230 = sbr.rel (%p1228) target = $region60
        $region59: #{tpu_custom_call.1} parent=55 // pred_region
          %s1231 = sand.u32 %s126, 1
          %s1232 = scalar_lea.sflag [#allocation5], %s1231
          %s1233 = sand.u32 %s126, 1
          %s1234 = smul.addr %s1233, 64
          %s1235 = scalar_lea.vmem [#allocation9], %s1234
          %1237 = dma.done %s1232, 1024
        $region60: #{tpu_custom_call.1} parent=55 // pred_fallthru
          _
      $region56: #{tpu_custom_call.1} parent=5 // pred_fallthru
        _
    $region6: #{tpu_custom_call.1} parent=1 // loop_footer
      %s22 = sadd.s32 1, %s18
    $region7: #{tpu_custom_call.1} parent=1 // loop_footer_branch
      %17 = sbr.rel target = $region3
    $region8: #{tpu_custom_call.1} parent=1 // loop_exit
      _
    %1238 = vsyncpa [#allocation4], 1
    %s1239 = scalar_lea.sflag [#allocation4], 1
    %1240 = vsyncpa %s1239, 1
    %1241 = vsyncpa [#allocation7], 1
    %s1242 = scalar_lea.sflag [#allocation7], 1
    %1243 = vsyncpa %s1242, 1
    %1244 = vsyncpa [#allocation5], 1
    %s1245 = scalar_lea.sflag [#allocation5], 1
    %1246 = vsyncpa %s1245, 1

</llo_original>
